<compile_context>
chip_gen: v5e
topology: v5e:2x2
jax: 0.10.0
libtpu: 0.0.40
codegen_flags: <defaults>
</compile_context>

<pallas_src>
import functools

import jax
import jax.numpy as jnp
from jax import lax
from jax.experimental import pallas as pl
from jax.experimental.pallas import tpu as pltpu

LN_EPS = 1e-5
MAX_LOCAL_TOKENS = 196   # original SAP forward uses at most 196 patch tokens


def _softmax_lastdim(x, approx_recip):
    m = jnp.max(x, axis=-1, keepdims=True)
    e = jnp.exp(x - m)
    s = jnp.sum(e, axis=-1, keepdims=True)
    if approx_recip:
        # EUP slot (approx reciprocal) instead of a VPU divide.
        return e * pl.reciprocal(s, approx=True)
    return e / s


def _custom_clip_kernel(feat_ref, ln_w_ref, ln_b_ref, proj_ref, bias_ref,
                        attr_ref, fold_ref, out_ref, *, approx_recip):
    # feat_ref block: (Bt, F, W) — Bt images per grid step.
    x = feat_ref[...]                                               # (Bt,F,W)
    bt, f_tok, _ = x.shape
    a_attr, d_dim = attr_ref.shape

    # ---------------- ln_post (LayerNorm over vision width, f32) -----------
    mu = jnp.mean(x, axis=-1, keepdims=True)
    var = jnp.mean((x - mu) * (x - mu), axis=-1, keepdims=True)
    xn = (x - mu) * lax.rsqrt(var + LN_EPS)
    xn = xn * ln_w_ref[...] + ln_b_ref[...]                          # (Bt,F,W)

    # ------------- projection + learnable bias (batched MXU matmul) --------
    # bf16 inputs (fast path) with f32 accumulation; batched einsum keeps the
    # contraction on the last dims (no XLU transposes).
    proj_b = jnp.broadcast_to(proj_ref[...][None, :, :],
                              (bt,) + proj_ref.shape)                # (Bt,W,D)
    y = jnp.einsum('bfw,bwd->bfd', xn.astype(proj_ref.dtype), proj_b,
                   preferred_element_type=jnp.float32)               # (Bt,F,D)

    g = y[:, 0:1, :]                                                 # (Bt,1,D) CLS (no bias)
    n_local = min(f_tok - 1, MAX_LOCAL_TOKENS)
    local = y[:, 1:1 + n_local, :] + bias_ref[...]                   # (Bt,L,D)

    attr = jnp.broadcast_to(attr_ref[...][None, :, :],
                            (bt, a_attr, d_dim))                     # (Bt,A,D)

    # attribute relevance: softmax_A( global . attr )
    rel = _softmax_lastdim(
        jnp.einsum('bqd,bad->bqa', g, attr,
                   preferred_element_type=jnp.float32),
        approx_recip)                                                # (Bt,1,A)

    # cross attention attributes -> patches
    cal = jnp.einsum('bad,bld->bal', attr, local,
                     preferred_element_type=jnp.float32)             # (Bt,A,L)
    catt = _softmax_lastdim(cal, approx_recip)                       # (Bt,A,L)
    cross = jnp.einsum('bal,bld->bad', catt, local,
                       preferred_element_type=jnp.float32)           # (Bt,A,D)

    # local score = sum_A rel * max_L(catt)
    max_att = jnp.max(catt, axis=-1, keepdims=True)                  # (Bt,A,1)
    local_score = jnp.einsum('bqa,bak->bqk', rel, max_att,
                             preferred_element_type=jnp.float32)     # (Bt,1,1)

    final_cross = jnp.einsum('bqa,bad->bqd', rel, cross,
                             preferred_element_type=jnp.float32)     # (Bt,1,D)
    final = (1.0 - local_score) * g + local_score * final_cross      # (Bt,1,D)

    # single intermediate layer -> mean over the layer dim is identity
    cif = final * lax.rsqrt(
        jnp.sum(final * final, axis=-1, keepdims=True))              # (Bt,1,D)

    # text-normalization, logit scale and class-attribute pooling were folded
    # into a single (D, C) matrix in the wrapper -> one matmul here.
    fold_b = jnp.broadcast_to(fold_ref[...][None, :, :],
                              (bt,) + fold_ref.shape)                # (Bt,D,C)
    out_ref[...] = jnp.einsum('bqd,bdc->bqc', cif, fold_b,
                              preferred_element_type=jnp.float32)    # (Bt,1,C)


def custom_clip_forward(feats, ln_w, ln_b, proj, mybias, attr_feats,
                        text_feats, class_attr_mask, logit_scale, *,
                        block_b=8, precise=False, vmem_limit_bytes=None):
    """feats: (B, F, W) intermediate ViT features; returns class logits (B, C)."""
    B, F_tok, W = feats.shape
    D = proj.shape[1]
    A = attr_feats.shape[0]
    P = text_feats.shape[0]
    C = class_attr_mask.shape[0]
    assert P == A and class_attr_mask.shape[1] == A  # one prompt per attribute

    # ---- loop-invariant folding (done once, outside the per-image kernel) ----
    tn = text_feats * lax.rsqrt(
        jnp.sum(text_feats * text_feats, axis=-1, keepdims=True))     # (P,D)
    mask_norm = class_attr_mask / class_attr_mask.sum(axis=-1, keepdims=True)
    fold = (jnp.exp(logit_scale) * (tn.T @ mask_norm.T)).astype(jnp.float32)  # (D,C)

    mm_dtype = jnp.float32 if precise else jnp.bfloat16

    # Batch several images per grid step (multiple of 8 keeps stores sublane-dense).
    bt = ((max(1, block_b) + 7) // 8) * 8
    b_pad = ((B + bt - 1) // bt) * bt
    feats_p = feats.astype(jnp.float32)
    if b_pad != B:
        feats_p = jnp.pad(feats_p, ((0, b_pad - B), (0, 0), (0, 0)))

    kernel = functools.partial(_custom_clip_kernel, approx_recip=not precise)

    grid_spec = pltpu.PrefetchScalarGridSpec(
        num_scalar_prefetch=0,
        grid=(b_pad // bt,),
        in_specs=[
            pl.BlockSpec((bt, F_tok, W), lambda i: (i, 0, 0)),   # feats
            pl.BlockSpec((1, W), lambda i: (0, 0)),              # ln_post weight
            pl.BlockSpec((1, W), lambda i: (0, 0)),              # ln_post bias
            pl.BlockSpec((W, D), lambda i: (0, 0)),              # proj (bf16/f32)
            pl.BlockSpec((1, D), lambda i: (0, 0)),              # mybias
            pl.BlockSpec((A, D), lambda i: (0, 0)),              # attr features
            pl.BlockSpec((D, C), lambda i: (0, 0)),              # folded text/mask/scale
        ],
        out_specs=pl.BlockSpec((bt, 1, C), lambda i: (i, 0, 0)),
    )

    out = pl.pallas_call(
        kernel,
        out_shape=jax.ShapeDtypeStruct((b_pad, 1, C), jnp.float32),
        grid_spec=grid_spec,
        compiler_params=pltpu.CompilerParams(
            # batch steps are fully independent -> shard across TCs on v7x
            dimension_semantics=("parallel",),
            vmem_limit_bytes=vmem_limit_bytes),
    )(feats_p,
      ln_w.reshape(1, W).astype(jnp.float32),
      ln_b.reshape(1, W).astype(jnp.float32),
      proj.astype(mm_dtype),
      mybias.reshape(1, D).astype(jnp.float32),
      attr_feats.astype(jnp.float32),
      fold)
    return out[:B, 0, :]


def custom_clip_reference(feats, ln_w, ln_b, proj, mybias, attr_feats,
                          text_feats, class_attr_mask, logit_scale,
                          mm_dtype=jnp.float32):
    """Pure-JAX reference mirroring the PyTorch CustomCLIP.forward semantics.

    `mm_dtype` only rounds the projection-matmul inputs (to model the bf16
    fast path); all arithmetic stays in f32.
    """
    mu = jnp.mean(feats, axis=-1, keepdims=True)
    var = jnp.mean((feats - mu) ** 2, axis=-1, keepdims=True)
    x = (feats - mu) / jnp.sqrt(var + LN_EPS) * ln_w + ln_b
    y = (x.astype(mm_dtype).astype(jnp.float32)
         @ proj.astype(mm_dtype).astype(jnp.float32))                 # (B,F,D)
    B, F_tok, D = y.shape
    bias = jnp.concatenate(
        [jnp.zeros((B, 1, D), jnp.float32),
         jnp.broadcast_to(mybias.reshape(1, 1, -1), (B, F_tok - 1, D))], axis=1)
    y = y + bias
    g = y[:, 0:1, :]                                                  # (B,1,D)
    local = y[:, 1:1 + MAX_LOCAL_TOKENS, :]                           # (B,L,D)
    rel = jax.nn.softmax(g[:, 0, :] @ attr_feats.T, axis=-1)          # (B,A)
    cal = jnp.einsum('ad,bld->bal', attr_feats, local)                # (B,A,L)
    catt = jax.nn.softmax(cal, axis=-1)
    cross = jnp.einsum('bal,bld->bad', catt, local)                   # (B,A,D)
    local_score = jnp.sum(rel * jnp.max(catt, axis=-1), axis=-1)      # (B,)
    fin = jnp.einsum('ba,bad->bd', rel, cross)[:, None, :]            # (B,1,D)
    fin = (1 - local_score)[:, None, None] * g + local_score[:, None, None] * fin
    cif = fin[:, 0, :]
    cif = cif / jnp.linalg.norm(cif, axis=-1, keepdims=True)
    tn = text_feats / jnp.linalg.norm(text_feats, axis=-1, keepdims=True)
    logits = jnp.exp(logit_scale) * (cif @ tn.T)
    mask_norm = class_attr_mask / class_attr_mask.sum(axis=-1, keepdims=True)
    return logits @ mask_norm.T


if __name__ == "__main__":
    # Small deterministic shapes: B=16 images, F=1+8 tokens, vision width W=32,
    # embed dim D=16, A=6 attributes (2 per class), C=3 classes, P=A prompts.
    B, L, W, D, A, C = 16, 8, 32, 16, 6, 3
    F_tok = 1 + L
    P = A

    key = jax.random.PRNGKey(0)
    ks = jax.random.split(key, 8)
    feats = jax.random.normal(ks[0], (B, F_tok, W), jnp.float32)
    ln_w = 1.0 + 0.05 * jax.random.normal(ks[1], (W,), jnp.float32)
    ln_b = 0.05 * jax.random.normal(ks[2], (W,), jnp.float32)
    proj = jax.random.normal(ks[3], (W, D), jnp.float32) / jnp.sqrt(W)
    mybias = 0.02 * jax.random.normal(ks[4], (D,), jnp.float32)
    attr_feats = jax.random.normal(ks[5], (A, D), jnp.float32)
    text_feats = jax.random.normal(ks[6], (P, D), jnp.float32)
    logit_scale = jnp.float32(jnp.log(1.0 / 0.07))

    class_attr_mask = jnp.zeros((C, A), jnp.float32)
    for c in range(C):
        class_attr_mask = class_attr_mask.at[c, 2 * c:2 * c + 2].set(1.0)

    args = (feats, ln_w, ln_b, proj, mybias, attr_feats, text_feats,
            class_attr_mask, logit_scale)

    # Precise path (f32 matmuls, exact divides) vs. exact reference.
    out_precise = custom_clip_forward(*args, block_b=8, precise=True)
    jax.block_until_ready(out_precise)
    ref = custom_clip_reference(*args)
    assert out_precise.shape == (B, C)
    assert jnp.allclose(out_precise, ref, rtol=1e-3, atol=1e-3), (out_precise, ref)

    # Fast path (bf16 projection inputs + approx EUP reciprocals) vs. a
    # reference that applies the same bf16 rounding to the projection inputs.
    out_fast = custom_clip_forward(*args, block_b=8, precise=False)
    jax.block_until_ready(out_fast)
    ref_bf16 = custom_clip_reference(*args, mm_dtype=jnp.bfloat16)
    assert out_fast.shape == (B, C)
    assert jnp.allclose(out_fast, ref_bf16, rtol=3e-2, atol=3e-2), (out_fast, ref_bf16)

    print("KERNEL_OK")
</pallas_src>

<mosaic_0001>
module attributes {stable_mosaic.version = 11 : i64} {
  func.func @_custom_clip_kernel(%arg0: i32, %arg1: memref<8x9x32xf32, #tpu.memory_space<vmem>>, %arg2: memref<1x32xf32, #tpu.memory_space<vmem>>, %arg3: memref<1x32xf32, #tpu.memory_space<vmem>>, %arg4: memref<32x16xf32, #tpu.memory_space<vmem>>, %arg5: memref<1x16xf32, #tpu.memory_space<vmem>>, %arg6: memref<6x16xf32, #tpu.memory_space<vmem>>, %arg7: memref<16x3xf32, #tpu.memory_space<vmem>>, %arg8: memref<8x1x3xf32, #tpu.memory_space<vmem>>) attributes {dimension_semantics = [#tpu.dimension_semantics<parallel>], iteration_bounds = array<i64: 2>, scalar_prefetch = 0 : i64, scratch_operands = 0 : i64, tpu.core_type = #tpu.core_type<tc>, window_params = [{transform_indices = @transform_0, window_bounds = array<i64: 8, 9, 32>}, {pipeline_mode = #tpu.pipeline_mode<synchronous>, transform_indices = @transform_1, window_bounds = array<i64: 1, 32>}, {pipeline_mode = #tpu.pipeline_mode<synchronous>, transform_indices = @transform_2, window_bounds = array<i64: 1, 32>}, {pipeline_mode = #tpu.pipeline_mode<synchronous>, transform_indices = @transform_3, window_bounds = array<i64: 32, 16>}, {pipeline_mode = #tpu.pipeline_mode<synchronous>, transform_indices = @transform_4, window_bounds = array<i64: 1, 16>}, {pipeline_mode = #tpu.pipeline_mode<synchronous>, transform_indices = @transform_5, window_bounds = array<i64: 6, 16>}, {pipeline_mode = #tpu.pipeline_mode<synchronous>, transform_indices = @transform_6, window_bounds = array<i64: 16, 3>}, {transform_indices = @transform_7, window_bounds = array<i64: 8, 1, 3>}]} {
    %c0 = arith.constant 0 : index
    %c0_0 = arith.constant 0 : index
    %c0_1 = arith.constant 0 : index
    %0 = vector.load %arg1[%c0, %c0_0, %c0_1] : memref<8x9x32xf32, #tpu.memory_space<vmem>>, vector<8x9x32xf32>
    %cst = arith.constant dense<0.000000e+00> : vector<8x9xf32>
    %1 = vector.multi_reduction <add>, %0, %cst [2] : vector<8x9x32xf32> to vector<8x9xf32>
    %2 = vector.shape_cast %1 : vector<8x9xf32> to vector<8x9x1xf32>
    %cst_2 = arith.constant 3.200000e+01 : f32
    %3 = vector.broadcast %cst_2 : f32 to vector<8x9x1xf32>
    %4 = arith.divf %2, %3 : vector<8x9x1xf32>
    %5 = vector.broadcast %4 : vector<8x9x1xf32> to vector<8x9x32xf32>
    %6 = arith.subf %0, %5 : vector<8x9x32xf32>
    %7 = vector.broadcast %4 : vector<8x9x1xf32> to vector<8x9x32xf32>
    %8 = arith.subf %0, %7 : vector<8x9x32xf32>
    %9 = arith.mulf %6, %8 : vector<8x9x32xf32>
    %cst_3 = arith.constant dense<0.000000e+00> : vector<8x9xf32>
    %10 = vector.multi_reduction <add>, %9, %cst_3 [2] : vector<8x9x32xf32> to vector<8x9xf32>
    %11 = vector.shape_cast %10 : vector<8x9xf32> to vector<8x9x1xf32>
    %cst_4 = arith.constant 3.200000e+01 : f32
    %12 = vector.broadcast %cst_4 : f32 to vector<8x9x1xf32>
    %13 = arith.divf %11, %12 : vector<8x9x1xf32>
    %14 = vector.broadcast %4 : vector<8x9x1xf32> to vector<8x9x32xf32>
    %15 = arith.subf %0, %14 : vector<8x9x32xf32>
    %cst_5 = arith.constant 9.99999974E-6 : f32
    %16 = vector.broadcast %cst_5 : f32 to vector<8x9x1xf32>
    %17 = arith.addf %13, %16 : vector<8x9x1xf32>
    %18 = math.rsqrt %17 : vector<8x9x1xf32>
    %19 = vector.broadcast %18 : vector<8x9x1xf32> to vector<8x9x32xf32>
    %20 = arith.mulf %15, %19 : vector<8x9x32xf32>
    %c0_6 = arith.constant 0 : index
    %c0_7 = arith.constant 0 : index
    %21 = vector.load %arg2[%c0_6, %c0_7] : memref<1x32xf32, #tpu.memory_space<vmem>>, vector<1x32xf32>
    %22 = vector.shape_cast %21 : vector<1x32xf32> to vector<1x1x32xf32>
    %23 = vector.broadcast %22 : vector<1x1x32xf32> to vector<8x9x32xf32>
    %24 = arith.mulf %20, %23 : vector<8x9x32xf32>
    %c0_8 = arith.constant 0 : index
    %c0_9 = arith.constant 0 : index
    %25 = vector.load %arg3[%c0_8, %c0_9] : memref<1x32xf32, #tpu.memory_space<vmem>>, vector<1x32xf32>
    %26 = vector.shape_cast %25 : vector<1x32xf32> to vector<1x1x32xf32>
    %27 = vector.broadcast %26 : vector<1x1x32xf32> to vector<8x9x32xf32>
    %28 = arith.addf %24, %27 : vector<8x9x32xf32>
    %c0_10 = arith.constant 0 : index
    %c0_11 = arith.constant 0 : index
    %29 = vector.load %arg4[%c0_10, %c0_11] : memref<32x16xf32, #tpu.memory_space<vmem>>, vector<32x16xf32>
    %30 = vector.shape_cast %29 : vector<32x16xf32> to vector<1x32x16xf32>
    %31 = vector.shape_cast %30 : vector<1x32x16xf32> to vector<1x32x16xf32>
    %32 = vector.broadcast %31 : vector<1x32x16xf32> to vector<8x32x16xf32>
    "tpu.trace_start"() <{level = 10 : i32, message = "bfw,bwd->bfd"}> : () -> ()
    %cst_12 = arith.constant dense<0.000000e+00> : vector<8x9x16xf32>
    %33 = tpu.matmul %28, %32, %cst_12 {dimension_numbers = #tpu.dot_dimension_numbers<[2], [1], [1], [2], [0, 0, 0, 1, 1, 2], [0], [0]>} : vector<8x9x32xf32>, vector<8x32x16xf32>, vector<8x9x16xf32> -> vector<8x9x16xf32>
    "tpu.trace_stop"() : () -> ()
    %34 = vector.extract_strided_slice %33 {offsets = [0, 0, 0], sizes = [8, 1, 16], strides = [1, 1, 1]} : vector<8x9x16xf32> to vector<8x1x16xf32>
    %35 = vector.extract_strided_slice %33 {offsets = [0, 1, 0], sizes = [8, 8, 16], strides = [1, 1, 1]} : vector<8x9x16xf32> to vector<8x8x16xf32>
    %c0_13 = arith.constant 0 : index
    %c0_14 = arith.constant 0 : index
    %36 = vector.load %arg5[%c0_13, %c0_14] : memref<1x16xf32, #tpu.memory_space<vmem>>, vector<1x16xf32>
    %37 = vector.shape_cast %36 : vector<1x16xf32> to vector<1x1x16xf32>
    %38 = vector.broadcast %37 : vector<1x1x16xf32> to vector<8x8x16xf32>
    %39 = arith.addf %35, %38 : vector<8x8x16xf32>
    %c0_15 = arith.constant 0 : index
    %c0_16 = arith.constant 0 : index
    %40 = vector.load %arg6[%c0_15, %c0_16] : memref<6x16xf32, #tpu.memory_space<vmem>>, vector<6x16xf32>
    %41 = vector.shape_cast %40 : vector<6x16xf32> to vector<1x6x16xf32>
    %42 = vector.shape_cast %41 : vector<1x6x16xf32> to vector<1x6x16xf32>
    %43 = vector.broadcast %42 : vector<1x6x16xf32> to vector<8x6x16xf32>
    "tpu.trace_start"() <{level = 10 : i32, message = "bqd,bad->bqa"}> : () -> ()
    %cst_17 = arith.constant dense<0.000000e+00> : vector<8x1x6xf32>
    %44 = tpu.matmul %34, %43, %cst_17 {dimension_numbers = #tpu.dot_dimension_numbers<[2], [2], [1], [1], [0, 0, 0, 1, 1, 1], [0], [0]>} : vector<8x1x16xf32>, vector<8x6x16xf32>, vector<8x1x6xf32> -> vector<8x1x6xf32>
    "tpu.trace_stop"() : () -> ()
    %cst_18 = arith.constant dense<0xFF800000> : vector<8x1xf32>
    %45 = vector.multi_reduction <maximumf>, %44, %cst_18 [2] : vector<8x1x6xf32> to vector<8x1xf32>
    %46 = vector.shape_cast %45 : vector<8x1xf32> to vector<8x1x1xf32>
    %47 = vector.broadcast %46 : vector<8x1x1xf32> to vector<8x1x6xf32>
    %48 = arith.subf %44, %47 : vector<8x1x6xf32>
    %49 = math.exp %48 : vector<8x1x6xf32>
    %cst_19 = arith.constant dense<0.000000e+00> : vector<8x1xf32>
    %50 = vector.multi_reduction <add>, %49, %cst_19 [2] : vector<8x1x6xf32> to vector<8x1xf32>
    %51 = vector.shape_cast %50 : vector<8x1xf32> to vector<8x1x1xf32>
    %52 = vector.broadcast %51 : vector<8x1x1xf32> to vector<8x1x6xf32>
    %53 = arith.divf %49, %52 : vector<8x1x6xf32>
    "tpu.trace_start"() <{level = 10 : i32, message = "bad,bld->bal"}> : () -> ()
    %cst_20 = arith.constant dense<0.000000e+00> : vector<8x6x8xf32>
    %54 = tpu.matmul %43, %39, %cst_20 {dimension_numbers = #tpu.dot_dimension_numbers<[2], [2], [1], [1], [0, 0, 0, 1, 1, 1], [0], [0]>} : vector<8x6x16xf32>, vector<8x8x16xf32>, vector<8x6x8xf32> -> vector<8x6x8xf32>
    "tpu.trace_stop"() : () -> ()
    %cst_21 = arith.constant dense<0xFF800000> : vector<8x6xf32>
    %55 = vector.multi_reduction <maximumf>, %54, %cst_21 [2] : vector<8x6x8xf32> to vector<8x6xf32>
    %56 = vector.shape_cast %55 : vector<8x6xf32> to vector<8x6x1xf32>
    %57 = vector.broadcast %56 : vector<8x6x1xf32> to vector<8x6x8xf32>
    %58 = arith.subf %54, %57 : vector<8x6x8xf32>
    %59 = math.exp %58 : vector<8x6x8xf32>
    %cst_22 = arith.constant dense<0.000000e+00> : vector<8x6xf32>
    %60 = vector.multi_reduction <add>, %59, %cst_22 [2] : vector<8x6x8xf32> to vector<8x6xf32>
    %61 = vector.shape_cast %60 : vector<8x6xf32> to vector<8x6x1xf32>
    %62 = vector.broadcast %61 : vector<8x6x1xf32> to vector<8x6x8xf32>
    %63 = arith.divf %59, %62 : vector<8x6x8xf32>
    "tpu.trace_start"() <{level = 10 : i32, message = "bal,bld->bad"}> : () -> ()
    %cst_23 = arith.constant dense<0.000000e+00> : vector<8x6x16xf32>
    %64 = tpu.matmul %63, %39, %cst_23 {dimension_numbers = #tpu.dot_dimension_numbers<[2], [1], [1], [2], [0, 0, 0, 1, 1, 2], [0], [0]>} : vector<8x6x8xf32>, vector<8x8x16xf32>, vector<8x6x16xf32> -> vector<8x6x16xf32>
    "tpu.trace_stop"() : () -> ()
    %cst_24 = arith.constant dense<0xFF800000> : vector<8x6xf32>
    %65 = vector.multi_reduction <maximumf>, %63, %cst_24 [2] : vector<8x6x8xf32> to vector<8x6xf32>
    %66 = vector.shape_cast %65 : vector<8x6xf32> to vector<8x6x1xf32>
    "tpu.trace_start"() <{level = 10 : i32, message = "bqa,bak->bqk"}> : () -> ()
    %cst_25 = arith.constant dense<0.000000e+00> : vector<8x1x1xf32>
    %67 = tpu.matmul %53, %66, %cst_25 {dimension_numbers = #tpu.dot_dimension_numbers<[2], [1], [1], [2], [0, 0, 0, 1, 1, 2], [0], [0]>} : vector<8x1x6xf32>, vector<8x6x1xf32>, vector<8x1x1xf32> -> vector<8x1x1xf32>
    "tpu.trace_stop"() : () -> ()
    "tpu.trace_start"() <{level = 10 : i32, message = "bqa,bad->bqd"}> : () -> ()
    %cst_26 = arith.constant dense<0.000000e+00> : vector<8x1x16xf32>
    %68 = tpu.matmul %53, %64, %cst_26 {dimension_numbers = #tpu.dot_dimension_numbers<[2], [1], [1], [2], [0, 0, 0, 1, 1, 2], [0], [0]>} : vector<8x1x6xf32>, vector<8x6x16xf32>, vector<8x1x16xf32> -> vector<8x1x16xf32>
    "tpu.trace_stop"() : () -> ()
    %cst_27 = arith.constant 1.000000e+00 : f32
    %69 = vector.broadcast %cst_27 : f32 to vector<8x1x1xf32>
    %70 = arith.subf %69, %67 : vector<8x1x1xf32>
    %71 = vector.broadcast %70 : vector<8x1x1xf32> to vector<8x1x16xf32>
    %72 = arith.mulf %71, %34 : vector<8x1x16xf32>
    %73 = vector.broadcast %67 : vector<8x1x1xf32> to vector<8x1x16xf32>
    %74 = arith.mulf %73, %68 : vector<8x1x16xf32>
    %75 = arith.addf %72, %74 : vector<8x1x16xf32>
    %76 = arith.mulf %75, %75 : vector<8x1x16xf32>
    %cst_28 = arith.constant dense<0.000000e+00> : vector<8x1xf32>
    %77 = vector.multi_reduction <add>, %76, %cst_28 [2] : vector<8x1x16xf32> to vector<8x1xf32>
    %78 = vector.shape_cast %77 : vector<8x1xf32> to vector<8x1x1xf32>
    %79 = math.rsqrt %78 : vector<8x1x1xf32>
    %80 = vector.broadcast %79 : vector<8x1x1xf32> to vector<8x1x16xf32>
    %81 = arith.mulf %75, %80 : vector<8x1x16xf32>
    %c0_29 = arith.constant 0 : index
    %c0_30 = arith.constant 0 : index
    %82 = vector.load %arg7[%c0_29, %c0_30] : memref<16x3xf32, #tpu.memory_space<vmem>>, vector<16x3xf32>
    %83 = vector.shape_cast %82 : vector<16x3xf32> to vector<1x16x3xf32>
    %84 = vector.shape_cast %83 : vector<1x16x3xf32> to vector<1x16x3xf32>
    %85 = vector.broadcast %84 : vector<1x16x3xf32> to vector<8x16x3xf32>
    "tpu.trace_start"() <{level = 10 : i32, message = "bqd,bdc->bqc"}> : () -> ()
    %cst_31 = arith.constant dense<0.000000e+00> : vector<8x1x3xf32>
    %86 = tpu.matmul %81, %85, %cst_31 {dimension_numbers = #tpu.dot_dimension_numbers<[2], [1], [1], [2], [0, 0, 0, 1, 1, 2], [0], [0]>} : vector<8x1x16xf32>, vector<8x16x3xf32>, vector<8x1x3xf32> -> vector<8x1x3xf32>
    "tpu.trace_stop"() : () -> ()
    %c0_32 = arith.constant 0 : index
    %c0_33 = arith.constant 0 : index
    %c0_34 = arith.constant 0 : index
    %87 = vector.load %arg8[%c0_32, %c0_33, %c0_34] : memref<8x1x3xf32, #tpu.memory_space<vmem>>, vector<8x1x3xf32>
    tpu.vector_store %arg8[%c0_32, %c0_33, %c0_34], %86 {strides = array<i32>} : memref<8x1x3xf32, #tpu.memory_space<vmem>>, vector<8x1x3xf32>,
    return
  }
  func.func @transform_0(%arg0: i32) -> (i32, i32, i32) {
    %c0_i32 = arith.constant 0 : i32
    %c0_i32_0 = arith.constant 0 : i32
    %c0_i32_1 = arith.constant 0 : i32
    return %arg0, %c0_i32, %c0_i32_0 : i32, i32, i32
  }
  func.func @transform_1(%arg0: i32) -> (i32, i32) {
    %c0_i32 = arith.constant 0 : i32
    %c0_i32_0 = arith.constant 0 : i32
    %c0_i32_1 = arith.constant 0 : i32
    return %c0_i32, %c0_i32_0 : i32, i32
  }
  func.func @transform_2(%arg0: i32) -> (i32, i32) {
    %c0_i32 = arith.constant 0 : i32
    %c0_i32_0 = arith.constant 0 : i32
    %c0_i32_1 = arith.constant 0 : i32
    return %c0_i32, %c0_i32_0 : i32, i32
  }
  func.func @transform_3(%arg0: i32) -> (i32, i32) {
    %c0_i32 = arith.constant 0 : i32
    %c0_i32_0 = arith.constant 0 : i32
    %c0_i32_1 = arith.constant 0 : i32
    return %c0_i32, %c0_i32_0 : i32, i32
  }
  func.func @transform_4(%arg0: i32) -> (i32, i32) {
    %c0_i32 = arith.constant 0 : i32
    %c0_i32_0 = arith.constant 0 : i32
    %c0_i32_1 = arith.constant 0 : i32
    return %c0_i32, %c0_i32_0 : i32, i32
  }
  func.func @transform_5(%arg0: i32) -> (i32, i32) {
    %c0_i32 = arith.constant 0 : i32
    %c0_i32_0 = arith.constant 0 : i32
    %c0_i32_1 = arith.constant 0 : i32
    return %c0_i32, %c0_i32_0 : i32, i32
  }
  func.func @transform_6(%arg0: i32) -> (i32, i32) {
    %c0_i32 = arith.constant 0 : i32
    %c0_i32_0 = arith.constant 0 : i32
    %c0_i32_1 = arith.constant 0 : i32
    return %c0_i32, %c0_i32_0 : i32, i32
  }
  func.func @transform_7(%arg0: i32) -> (i32, i32, i32) {
    %c0_i32 = arith.constant 0 : i32
    %c0_i32_0 = arith.constant 0 : i32
    %c0_i32_1 = arith.constant 0 : i32
    return %arg0, %c0_i32, %c0_i32_0 : i32, i32, i32
  }
}

</mosaic_0001>

<llo_original>
// kernel: tpu_custom_call.1
$region0: #{tpu_custom_call.1}
  #allocation0 [shape = 'u32[]', space=smem, size = 0x4, offset = 0x4, fixed_abs, tag = 'smem constant byte address 0x4 - core index']
  #allocation1 [shape = 'u32[72,128]{1,0:T(1,128)}', space=vmem, size = 0x9000, scoped, tag = 'internal scratch']
  %s0 = inlined_call_operand.vmem [shape: f32[16,9,32], index: 0, kind: input, shape index: {}]
  %s1 = inlined_call_operand.vmem [shape: f32[1,32], index: 1, kind: input, shape index: {}]
  %s2 = inlined_call_operand.vmem [shape: f32[1,32], index: 2, kind: input, shape index: {}]
  %s3 = inlined_call_operand.vmem [shape: f32[32,16], index: 3, kind: input, shape index: {}]
  %s4 = inlined_call_operand.vmem [shape: f32[1,16], index: 4, kind: input, shape index: {}]
  %s5 = inlined_call_operand.vmem [shape: f32[6,16], index: 5, kind: input, shape index: {}]
  %s6 = inlined_call_operand.vmem [shape: f32[16,3], index: 6, kind: input, shape index: {}]
  %s7 = inlined_call_operand.vmem [shape: f32[16,1,3], index: 7, kind: output, shape index: {}]
  %s8 = sld [smem:[#allocation0]]
  $region61: #{tpu_custom_call.1} parent=0
    _
  %s10 = ssub.s32 1, %s8
  %s11 = scalar_select 0, %s10, %s8
  loop: start=0, step=1, limit=4
  $region2: #{tpu_custom_call.1} parent=0 // loop_pre_header
    _
  $region3: #{tpu_custom_call.1} parent=0 // loop_header
    %s13 = sphi 0, %s17
    %p14 = scmp.ge.s32.totalorder %s13, 4
    %s23 = sphi 0, %s25
    %s26 = sphi 0, %s23
    %s27 = sphi 0, %s26
    %s43 = sphi 0, %s27
    %s47 = sphi 0, %s47
    %s49 = sphi 0, %s47
    %s50 = sphi 0, %s49
    %s64 = sphi 0, %s50
    %s68 = sphi 0, %s68
    %s70 = sphi 0, %s68
    %s71 = sphi 0, %s70
    %s85 = sphi 0, %s71
    %s89 = sphi 0, %s89
    %s91 = sphi 0, %s89
    %s92 = sphi 0, %s91
    %s106 = sphi 0, %s92
    %s110 = sphi 0, %s110
    %s112 = sphi 0, %s110
    %s113 = sphi 0, %s112
    %s127 = sphi 0, %s113
    %s131 = sphi 0, %s131
    %s133 = sphi 0, %s131
    %s134 = sphi 0, %s133
    %s148 = sphi 0, %s134
    %s152 = sphi 0, %s152
    %s154 = sphi 0, %s152
    %s155 = sphi 0, %s154
    %s169 = sphi 0, %s155
    %s175 = sphi 0, %s177
    %s178 = sphi 0, %s175
    %s179 = sphi 0, %s178
    %s195 = sphi 0, %s179
  $region4: #{tpu_custom_call.1} parent=0 // loop_header_branch
    %16 = sbr.rel (%p14) target = $region8
  $region5: #{tpu_custom_call.1} parent=0 // loop_body
    %s18 = ssub.s32 %s13, 1
    %s19 = ssub.s32 %s13, 2
    %s20 = sadd.s32 %s13, 1
    %s21 = ssub.s32 %s13, %s20
    %p22 = scmp.eq.s32.totalorder %s21, 0
    %s24 = sadd.s32 %s23, 1
    %s25 = scalar_select %p22, %s23, %s24
    %p28 = pneg %p22
    %p29 = scmp.eq.s32.totalorder %s13, 1
    %p30 = por %p28, %p29
    %p31 = scmp.ne.s32.totalorder %s23, %s26
    %p32 = scmp.eq.s32.totalorder %s13, 0
    %p33 = por %p31, %p32
    %p34 = scmp.ne.s32.totalorder %s23, %s26
    %p35 = scmp.eq.s32.totalorder %s18, 1
    %p36 = por %p34, %p35
    %p37 = scmp.ne.s32.totalorder %s26, %s27
    %p38 = scmp.eq.s32.totalorder %s18, 0
    %p39 = por %p37, %p38
    %p40 = scmp.ne.s32.totalorder %s26, %s27
    %p41 = scmp.eq.s32.totalorder %s19, 1
    %p42 = por %p40, %p41
    %p44 = scmp.ne.s32.totalorder %s27, %s43
    %p45 = scmp.eq.s32.totalorder %s19, 0
    %p46 = por %p44, %p45
    %s48 = sadd.s32 %s47, 1
    %p51 = scmp.eq.s32.totalorder %s13, 1
    %p52 = scmp.ne.s32.totalorder %s47, %s49
    %p53 = scmp.eq.s32.totalorder %s13, 0
    %p54 = por %p52, %p53
    %p55 = scmp.ne.s32.totalorder %s47, %s49
    %p56 = scmp.eq.s32.totalorder %s18, 1
    %p57 = por %p55, %p56
    %p58 = scmp.ne.s32.totalorder %s49, %s50
    %p59 = scmp.eq.s32.totalorder %s18, 0
    %p60 = por %p58, %p59
    %p61 = scmp.ne.s32.totalorder %s49, %s50
    %p62 = scmp.eq.s32.totalorder %s19, 1
    %p63 = por %p61, %p62
    %p65 = scmp.ne.s32.totalorder %s50, %s64
    %p66 = scmp.eq.s32.totalorder %s19, 0
    %p67 = por %p65, %p66
    %s69 = sadd.s32 %s68, 1
    %p72 = scmp.eq.s32.totalorder %s13, 1
    %p73 = scmp.ne.s32.totalorder %s68, %s70
    %p74 = scmp.eq.s32.totalorder %s13, 0
    %p75 = por %p73, %p74
    %p76 = scmp.ne.s32.totalorder %s68, %s70
    %p77 = scmp.eq.s32.totalorder %s18, 1
    %p78 = por %p76, %p77
    %p79 = scmp.ne.s32.totalorder %s70, %s71
    %p80 = scmp.eq.s32.totalorder %s18, 0
    %p81 = por %p79, %p80
    %p82 = scmp.ne.s32.totalorder %s70, %s71
    %p83 = scmp.eq.s32.totalorder %s19, 1
    %p84 = por %p82, %p83
    %p86 = scmp.ne.s32.totalorder %s71, %s85
    %p87 = scmp.eq.s32.totalorder %s19, 0
    %p88 = por %p86, %p87
    %s90 = sadd.s32 %s89, 1
    %p93 = scmp.eq.s32.totalorder %s13, 1
    %p94 = scmp.ne.s32.totalorder %s89, %s91
    %p95 = scmp.eq.s32.totalorder %s13, 0
    %p96 = por %p94, %p95
    %p97 = scmp.ne.s32.totalorder %s89, %s91
    %p98 = scmp.eq.s32.totalorder %s18, 1
    %p99 = por %p97, %p98
    %p100 = scmp.ne.s32.totalorder %s91, %s92
    %p101 = scmp.eq.s32.totalorder %s18, 0
    %p102 = por %p100, %p101
    %p103 = scmp.ne.s32.totalorder %s91, %s92
    %p104 = scmp.eq.s32.totalorder %s19, 1
    %p105 = por %p103, %p104
    %p107 = scmp.ne.s32.totalorder %s92, %s106
    %p108 = scmp.eq.s32.totalorder %s19, 0
    %p109 = por %p107, %p108
    %s111 = sadd.s32 %s110, 1
    %p114 = scmp.eq.s32.totalorder %s13, 1
    %p115 = scmp.ne.s32.totalorder %s110, %s112
    %p116 = scmp.eq.s32.totalorder %s13, 0
    %p117 = por %p115, %p116
    %p118 = scmp.ne.s32.totalorder %s110, %s112
    %p119 = scmp.eq.s32.totalorder %s18, 1
    %p120 = por %p118, %p119
    %p121 = scmp.ne.s32.totalorder %s112, %s113
    %p122 = scmp.eq.s32.totalorder %s18, 0
    %p123 = por %p121, %p122
    %p124 = scmp.ne.s32.totalorder %s112, %s113
    %p125 = scmp.eq.s32.totalorder %s19, 1
    %p126 = por %p124, %p125
    %p128 = scmp.ne.s32.totalorder %s113, %s127
    %p129 = scmp.eq.s32.totalorder %s19, 0
    %p130 = por %p128, %p129
    %s132 = sadd.s32 %s131, 1
    %p135 = scmp.eq.s32.totalorder %s13, 1
    %p136 = scmp.ne.s32.totalorder %s131, %s133
    %p137 = scmp.eq.s32.totalorder %s13, 0
    %p138 = por %p136, %p137
    %p139 = scmp.ne.s32.totalorder %s131, %s133
    %p140 = scmp.eq.s32.totalorder %s18, 1
    %p141 = por %p139, %p140
    %p142 = scmp.ne.s32.totalorder %s133, %s134
    %p143 = scmp.eq.s32.totalorder %s18, 0
    %p144 = por %p142, %p143
    %p145 = scmp.ne.s32.totalorder %s133, %s134
    %p146 = scmp.eq.s32.totalorder %s19, 1
    %p147 = por %p145, %p146
    %p149 = scmp.ne.s32.totalorder %s134, %s148
    %p150 = scmp.eq.s32.totalorder %s19, 0
    %p151 = por %p149, %p150
    %s153 = sadd.s32 %s152, 1
    %p156 = scmp.eq.s32.totalorder %s13, 1
    %p157 = scmp.ne.s32.totalorder %s152, %s154
    %p158 = scmp.eq.s32.totalorder %s13, 0
    %p159 = por %p157, %p158
    %p160 = scmp.ne.s32.totalorder %s152, %s154
    %p161 = scmp.eq.s32.totalorder %s18, 1
    %p162 = por %p160, %p161
    %p163 = scmp.ne.s32.totalorder %s154, %s155
    %p164 = scmp.eq.s32.totalorder %s18, 0
    %p165 = por %p163, %p164
    %p166 = scmp.ne.s32.totalorder %s154, %s155
    %p167 = scmp.eq.s32.totalorder %s19, 1
    %p168 = por %p166, %p167
    %p170 = scmp.ne.s32.totalorder %s155, %s169
    %p171 = scmp.eq.s32.totalorder %s19, 0
    %p172 = por %p170, %p171
    %s173 = ssub.s32 %s13, %s20
    %p174 = scmp.eq.s32.totalorder %s173, 0
    %s176 = sadd.s32 %s175, 1
    %s177 = scalar_select %p174, %s175, %s176
    %p180 = pneg %p174
    %p181 = scmp.eq.s32.totalorder %s13, 1
    %p182 = por %p180, %p181
    %p183 = scmp.ne.s32.totalorder %s175, %s178
    %p184 = scmp.eq.s32.totalorder %s13, 0
    %p185 = por %p183, %p184
    %p186 = scmp.ne.s32.totalorder %s175, %s178
    %p187 = scmp.eq.s32.totalorder %s18, 1
    %p188 = por %p186, %p187
    %p189 = scmp.ne.s32.totalorder %s178, %s179
    %p190 = scmp.eq.s32.totalorder %s18, 0
    %p191 = por %p189, %p190
    %p192 = scmp.ne.s32.totalorder %s178, %s179
    %p193 = scmp.eq.s32.totalorder %s19, 1
    %p194 = por %p192, %p193
    %p196 = scmp.ne.s32.totalorder %s179, %s195
    %p197 = scmp.eq.s32.totalorder %s19, 0
    %p198 = por %p196, %p197
    %p199 = scmp.le.s32.totalorder 1, %s13
    %p200 = scmp.lt.s32.totalorder %s13, 3
    %p201 = pnand %p199, %p200
    %p202 = pneg %p201
    // Predicated region
    $region9: #{tpu_custom_call.1} parent=5 // pred_check
      _
    $region10: #{tpu_custom_call.1} parent=5 // pred_check_branch
      %204 = sbr.rel (%p201) target = $region12
    $region11: #{tpu_custom_call.1} parent=5 // pred_region
      %s205 = ssub.s32 %s13, 1
      // Predicated region
      $region13: #{tpu_custom_call.1} parent=11 // pred_check
        %p206 = pneg %p60
      $region14: #{tpu_custom_call.1} parent=11 // pred_check_branch
        %208 = sbr.rel (%p206) target = $region16
      $region15: #{tpu_custom_call.1} parent=11 // pred_region
        _
      $region16: #{tpu_custom_call.1} parent=11 // pred_fallthru
        _
      // Predicated region
      $region17: #{tpu_custom_call.1} parent=11 // pred_check
        %p209 = pneg %p81
      $region18: #{tpu_custom_call.1} parent=11 // pred_check_branch
        %211 = sbr.rel (%p209) target = $region20
      $region19: #{tpu_custom_call.1} parent=11 // pred_region
        _
      $region20: #{tpu_custom_call.1} parent=11 // pred_fallthru
        _
      // Predicated region
      $region21: #{tpu_custom_call.1} parent=11 // pred_check
        %p212 = pneg %p102
      $region22: #{tpu_custom_call.1} parent=11 // pred_check_branch
        %214 = sbr.rel (%p212) target = $region24
      $region23: #{tpu_custom_call.1} parent=11 // pred_region
        _
      $region24: #{tpu_custom_call.1} parent=11 // pred_fallthru
        _
      // Predicated region
      $region25: #{tpu_custom_call.1} parent=11 // pred_check
        %p215 = pneg %p123
      $region26: #{tpu_custom_call.1} parent=11 // pred_check_branch
        %217 = sbr.rel (%p215) target = $region28
      $region27: #{tpu_custom_call.1} parent=11 // pred_region
        _
      $region28: #{tpu_custom_call.1} parent=11 // pred_fallthru
        _
      // Predicated region
      $region29: #{tpu_custom_call.1} parent=11 // pred_check
        %p218 = pneg %p144
      $region30: #{tpu_custom_call.1} parent=11 // pred_check_branch
        %220 = sbr.rel (%p218) target = $region32
      $region31: #{tpu_custom_call.1} parent=11 // pred_region
        _
      $region32: #{tpu_custom_call.1} parent=11 // pred_fallthru
        _
      // Predicated region
      $region33: #{tpu_custom_call.1} parent=11 // pred_check
        %p221 = pneg %p165
      $region34: #{tpu_custom_call.1} parent=11 // pred_check_branch
        %223 = sbr.rel (%p221) target = $region36
      $region35: #{tpu_custom_call.1} parent=11 // pred_region
        _
      $region36: #{tpu_custom_call.1} parent=11 // pred_fallthru
        _
    $region12: #{tpu_custom_call.1} parent=5 // pred_fallthru
      _
    %p224 = scmp.lt.s32.totalorder %s13, 2
    // Predicated region
    $region37: #{tpu_custom_call.1} parent=5 // pred_check
      %p225 = pneg %p224
    $region38: #{tpu_custom_call.1} parent=5 // pred_check_branch
      %227 = sbr.rel (%p225) target = $region40
    $region39: #{tpu_custom_call.1} parent=5 // pred_region
      // Predicated region
      $region41: #{tpu_custom_call.1} parent=39 // pred_check
        %p228 = pneg %p33
      $region42: #{tpu_custom_call.1} parent=39 // pred_check_branch
        %230 = sbr.rel (%p228) target = $region44
      $region43: #{tpu_custom_call.1} parent=39 // pred_region
        %s231 = smul.u32 8, %s13
        %p232 = scmp.lt.s32.totalorder %s231, 15
        %s233 = scalar_select %p232, %s231, 15
        %s234 = smul.addr %s233, 2
        %s235 = smul.addr %s234, 8
        %s236 = scalar_lea.vmem %s0, %s235
        %s237 = smul.u32 8, %s13
      $region44: #{tpu_custom_call.1} parent=39 // pred_fallthru
        _
    $region40: #{tpu_custom_call.1} parent=5 // pred_fallthru
      _
    %p238 = scmp.le.s32.totalorder 1, %s13
    %p239 = scmp.lt.s32.totalorder %s13, 3
    %p240 = pnand %p238, %p239
    %p241 = pneg %p240
    // Predicated region
    $region45: #{tpu_custom_call.1} parent=5 // pred_check
      _
    $region46: #{tpu_custom_call.1} parent=5 // pred_check_branch
      %243 = sbr.rel (%p240) target = $region48
    $region47: #{tpu_custom_call.1} parent=5 // pred_region
      %s244 = ssub.s32 %s13, 1
      %s245 = smul.u32 8, %s18
      %p246 = scmp.lt.s32.totalorder %s245, 15
      %s247 = scalar_select %p246, %s245, 15
      %s248 = smul.addr %s247, 2
      %s249 = smul.addr %s248, 8
      %s250 = scalar_lea.vmem %s0, %s249
      %p251 = pneg %p39
      %p252 = pneg %p36
      %p253 = pneg %p60
      %p254 = pneg %p57
      %p255 = pneg %p81
      %p256 = pneg %p78
      %p257 = pneg %p102
      %p258 = pneg %p99
      %p259 = pneg %p123
      %p260 = pneg %p120
      %p261 = pneg %p144
      %p262 = pneg %p141
      %p263 = pneg %p165
      %p264 = pneg %p162
      %p265 = pneg %p191
      %p266 = pneg %p188
      %s267 = smul.u32 8, %s18
      %p268 = scmp.lt.s32.totalorder %s267, 15
      %s269 = scalar_select %p268, %s267, 15
      %s270 = scalar_lea.vmem %s7, %s269
      %s271 = smul.u32 8, %s18
      %p272 = scmp.lt.s32.totalorder %s271, 15
      %s273 = scalar_select %p272, %s271, 15
      %s274 = smul.addr %s273, 2
      %s275 = smul.addr %s274, 8
      %s276 = scalar_lea.vmem %s0, %s275
      %s277 = smul.u32 8, %s18
      %s278 = smul.u32 8, %s18
      %p279 = scmp.lt.s32.totalorder %s278, 15
      %s280 = scalar_select %p279, %s278, 15
      %s281 = scalar_lea.vmem %s7, %s280
      %s282 = smul.u32 8, %s18
      %v283 = vld [vmem:[%s276] sm:$0xff]
      %v284 = vld [vmem:[%s276 + $0x8] sm:$0x1]
      %v285 = vld [vmem:[%s276 + $0x10] sm:$0xff]
      %v286 = vld [vmem:[%s276 + $0x18] sm:$0x1]
      %v287 = vld [vmem:[%s276 + $0x20] sm:$0xff]
      %v288 = vld [vmem:[%s276 + $0x28] sm:$0x1]
      %v289 = vld [vmem:[%s276 + $0x30] sm:$0xff]
      %v290 = vld [vmem:[%s276 + $0x38] sm:$0x1]
      %v291 = vld [vmem:[%s276 + $0x40] sm:$0xff]
      %v292 = vld [vmem:[%s276 + $0x48] sm:$0x1]
      %v293 = vld [vmem:[%s276 + $0x50] sm:$0xff]
      %v294 = vld [vmem:[%s276 + $0x58] sm:$0x1]
      %v295 = vld [vmem:[%s276 + $0x60] sm:$0xff]
      %v296 = vld [vmem:[%s276 + $0x68] sm:$0x1]
      %v297 = vld [vmem:[%s276 + $0x70] sm:$0xff]
      %v298 = vld [vmem:[%s276 + $0x78] sm:$0x1]
      %vm299 = vcmask 261120
      %v300 = vsel %vm299, %v283, 0.0
      %301 = vadd.xlane.f32.xlu0 %v300
      %v302 = vpop.xlane.xlu0 %301
      %vm303 = vcmask 253952
      %v304 = vsel %vm303, %v284, 0.0
      %305 = vadd.xlane.f32.xlu0 %v304
      %v306 = vpop.xlane.xlu0 %305
      %v307 = vsel %vm299, %v285, 0.0
      %308 = vadd.xlane.f32.xlu0 %v307
      %v309 = vpop.xlane.xlu0 %308
      %v310 = vsel %vm303, %v286, 0.0
      %311 = vadd.xlane.f32.xlu0 %v310
      %v312 = vpop.xlane.xlu0 %311
      %v313 = vsel %vm299, %v287, 0.0
      %314 = vadd.xlane.f32.xlu0 %v313
      %v315 = vpop.xlane.xlu0 %314
      %v316 = vsel %vm303, %v288, 0.0
      %317 = vadd.xlane.f32.xlu0 %v316
      %v318 = vpop.xlane.xlu0 %317
      %v319 = vsel %vm299, %v289, 0.0
      %320 = vadd.xlane.f32.xlu0 %v319
      %v321 = vpop.xlane.xlu0 %320
      %v322 = vsel %vm303, %v290, 0.0
      %323 = vadd.xlane.f32.xlu0 %v322
      %v324 = vpop.xlane.xlu0 %323
      %v325 = vsel %vm299, %v291, 0.0
      %326 = vadd.xlane.f32.xlu0 %v325
      %v327 = vpop.xlane.xlu0 %326
      %v328 = vsel %vm303, %v292, 0.0
      %329 = vadd.xlane.f32.xlu0 %v328
      %v330 = vpop.xlane.xlu0 %329
      %v331 = vsel %vm299, %v293, 0.0
      %332 = vadd.xlane.f32.xlu0 %v331
      %v333 = vpop.xlane.xlu0 %332
      %v334 = vsel %vm303, %v294, 0.0
      %335 = vadd.xlane.f32.xlu0 %v334
      %v336 = vpop.xlane.xlu0 %335
      %v337 = vsel %vm299, %v295, 0.0
      %338 = vadd.xlane.f32.xlu0 %v337
      %v339 = vpop.xlane.xlu0 %338
      %v340 = vsel %vm303, %v296, 0.0
      %341 = vadd.xlane.f32.xlu0 %v340
      %v342 = vpop.xlane.xlu0 %341
      %v343 = vsel %vm299, %v297, 0.0
      %344 = vadd.xlane.f32.xlu0 %v343
      %v345 = vpop.xlane.xlu0 %344
      %v346 = vsel %vm303, %v298, 0.0
      %347 = vadd.xlane.f32.xlu0 %v346
      %v348 = vpop.xlane.xlu0 %347
      %v349 = vrcp.pop 32.0
      %v350 = vmul.f32 32.0, %v349
      %v351 = vsub.f32 1.0, %v350
      %v352 = vmul.f32 %v349, %v351
      %v353 = vadd.f32 %v349, %v352
      %vm354 = vweird.f32 %v349
      %v355 = vsel %vm354, %v349, %v353
      %v356 = vmul.f32 %v302, %v355
      %v357 = vmul.f32 %v306, %v355
      %v358 = vmul.f32 %v309, %v355
      %v359 = vmul.f32 %v312, %v355
      %v360 = vmul.f32 %v315, %v355
      %v361 = vmul.f32 %v318, %v355
      %v362 = vmul.f32 %v321, %v355
      %v363 = vmul.f32 %v324, %v355
      %v364 = vmul.f32 %v327, %v355
      %v365 = vmul.f32 %v330, %v355
      %v366 = vmul.f32 %v333, %v355
      %v367 = vmul.f32 %v336, %v355
      %v368 = vmul.f32 %v339, %v355
      %v369 = vmul.f32 %v342, %v355
      %v370 = vmul.f32 %v345, %v355
      %v371 = vmul.f32 %v348, %v355
      %v372 = vsub.f32 %v283, %v356
      %v373 = vsub.f32 %v284, %v357
      %v374 = vsub.f32 %v285, %v358
      %v375 = vsub.f32 %v286, %v359
      %v376 = vsub.f32 %v287, %v360
      %v377 = vsub.f32 %v288, %v361
      %v378 = vsub.f32 %v289, %v362
      %v379 = vsub.f32 %v290, %v363
      %v380 = vsub.f32 %v291, %v364
      %v381 = vsub.f32 %v292, %v365
      %v382 = vsub.f32 %v293, %v366
      %v383 = vsub.f32 %v294, %v367
      %v384 = vsub.f32 %v295, %v368
      %v385 = vsub.f32 %v296, %v369
      %v386 = vsub.f32 %v297, %v370
      %v387 = vsub.f32 %v298, %v371
      %v388 = vmul.f32 %v372, %v372
      %v389 = vmul.f32 %v373, %v373
      %v390 = vmul.f32 %v374, %v374
      %v391 = vmul.f32 %v375, %v375
      %v392 = vmul.f32 %v376, %v376
      %v393 = vmul.f32 %v377, %v377
      %v394 = vmul.f32 %v378, %v378
      %v395 = vmul.f32 %v379, %v379
      %v396 = vmul.f32 %v380, %v380
      %v397 = vmul.f32 %v381, %v381
      %v398 = vmul.f32 %v382, %v382
      %v399 = vmul.f32 %v383, %v383
      %v400 = vmul.f32 %v384, %v384
      %v401 = vmul.f32 %v385, %v385
      %v402 = vmul.f32 %v386, %v386
      %v403 = vmul.f32 %v387, %v387
      %v404 = vsel %vm299, %v388, 0.0
      %405 = vadd.xlane.f32.xlu0 %v404
      %v406 = vpop.xlane.xlu0 %405
      %v407 = vsel %vm303, %v389, 0.0
      %408 = vadd.xlane.f32.xlu0 %v407
      %v409 = vpop.xlane.xlu0 %408
      %v410 = vsel %vm299, %v390, 0.0
      %411 = vadd.xlane.f32.xlu0 %v410
      %v412 = vpop.xlane.xlu0 %411
      %v413 = vsel %vm303, %v391, 0.0
      %414 = vadd.xlane.f32.xlu0 %v413
      %v415 = vpop.xlane.xlu0 %414
      %v416 = vsel %vm299, %v392, 0.0
      %417 = vadd.xlane.f32.xlu0 %v416
      %v418 = vpop.xlane.xlu0 %417
      %v419 = vsel %vm303, %v393, 0.0
      %420 = vadd.xlane.f32.xlu0 %v419
      %v421 = vpop.xlane.xlu0 %420
      %v422 = vsel %vm299, %v394, 0.0
      %423 = vadd.xlane.f32.xlu0 %v422
      %v424 = vpop.xlane.xlu0 %423
      %v425 = vsel %vm303, %v395, 0.0
      %426 = vadd.xlane.f32.xlu0 %v425
      %v427 = vpop.xlane.xlu0 %426
      %v428 = vsel %vm299, %v396, 0.0
      %429 = vadd.xlane.f32.xlu0 %v428
      %v430 = vpop.xlane.xlu0 %429
      %v431 = vsel %vm303, %v397, 0.0
      %432 = vadd.xlane.f32.xlu0 %v431
      %v433 = vpop.xlane.xlu0 %432
      %v434 = vsel %vm299, %v398, 0.0
      %435 = vadd.xlane.f32.xlu0 %v434
      %v436 = vpop.xlane.xlu0 %435
      %v437 = vsel %vm303, %v399, 0.0
      %438 = vadd.xlane.f32.xlu0 %v437
      %v439 = vpop.xlane.xlu0 %438
      %v440 = vsel %vm299, %v400, 0.0
      %441 = vadd.xlane.f32.xlu0 %v440
      %v442 = vpop.xlane.xlu0 %441
      %v443 = vsel %vm303, %v401, 0.0
      %444 = vadd.xlane.f32.xlu0 %v443
      %v445 = vpop.xlane.xlu0 %444
      %v446 = vsel %vm299, %v402, 0.0
      %447 = vadd.xlane.f32.xlu0 %v446
      %v448 = vpop.xlane.xlu0 %447
      %v449 = vsel %vm303, %v403, 0.0
      %450 = vadd.xlane.f32.xlu0 %v449
      %v451 = vpop.xlane.xlu0 %450
      %v452 = vmul.f32 %v406, %v355
      %v453 = vmul.f32 %v409, %v355
      %v454 = vmul.f32 %v412, %v355
      %v455 = vmul.f32 %v415, %v355
      %v456 = vmul.f32 %v418, %v355
      %v457 = vmul.f32 %v421, %v355
      %v458 = vmul.f32 %v424, %v355
      %v459 = vmul.f32 %v427, %v355
      %v460 = vmul.f32 %v430, %v355
      %v461 = vmul.f32 %v433, %v355
      %v462 = vmul.f32 %v436, %v355
      %v463 = vmul.f32 %v439, %v355
      %v464 = vmul.f32 %v442, %v355
      %v465 = vmul.f32 %v445, %v355
      %v466 = vmul.f32 %v448, %v355
      %v467 = vmul.f32 %v451, %v355
      %v468 = vadd.f32 %v452, 1e-05
      %v469 = vadd.f32 %v453, 1e-05
      %v470 = vadd.f32 %v454, 1e-05
      %v471 = vadd.f32 %v455, 1e-05
      %v472 = vadd.f32 %v456, 1e-05
      %v473 = vadd.f32 %v457, 1e-05
      %v474 = vadd.f32 %v458, 1e-05
      %v475 = vadd.f32 %v459, 1e-05
      %v476 = vadd.f32 %v460, 1e-05
      %v477 = vadd.f32 %v461, 1e-05
      %v478 = vadd.f32 %v462, 1e-05
      %v479 = vadd.f32 %v463, 1e-05
      %v480 = vadd.f32 %v464, 1e-05
      %v481 = vadd.f32 %v465, 1e-05
      %v482 = vadd.f32 %v466, 1e-05
      %v483 = vadd.f32 %v467, 1e-05
      %v484 = vrsqrt.pop %v468
      %v485 = vmul.f32 %v484, %v468
      %v486 = vmul.f32 %v485, %v484
      %v487 = vmul.f32 0.5, %v486
      %v488 = vsub.f32 1.5, %v487
      %v489 = vmul.f32 %v484, %v488
      %vm490 = vweird.f32 %v468
      %vm491 = vweird.f32 %v484
      %vm492 = vmor %vm490, %vm491
      %v493 = vsel %vm492, %v484, %v489
      %v494 = vrsqrt.pop %v469
      %v495 = vmul.f32 %v494, %v469
      %v496 = vmul.f32 %v495, %v494
      %v497 = vmul.f32 0.5, %v496
      %v498 = vsub.f32 1.5, %v497
      %v499 = vmul.f32 %v494, %v498
      %vm500 = vweird.f32 %v469
      %vm501 = vweird.f32 %v494
      %vm502 = vmor %vm500, %vm501
      %v503 = vsel %vm502, %v494, %v499
      %v504 = vrsqrt.pop %v470
      %v505 = vmul.f32 %v504, %v470
      %v506 = vmul.f32 %v505, %v504
      %v507 = vmul.f32 0.5, %v506
      %v508 = vsub.f32 1.5, %v507
      %v509 = vmul.f32 %v504, %v508
      %vm510 = vweird.f32 %v470
      %vm511 = vweird.f32 %v504
      %vm512 = vmor %vm510, %vm511
      %v513 = vsel %vm512, %v504, %v509
      %v514 = vrsqrt.pop %v471
      %v515 = vmul.f32 %v514, %v471
      %v516 = vmul.f32 %v515, %v514
      %v517 = vmul.f32 0.5, %v516
      %v518 = vsub.f32 1.5, %v517
      %v519 = vmul.f32 %v514, %v518
      %vm520 = vweird.f32 %v471
      %vm521 = vweird.f32 %v514
      %vm522 = vmor %vm520, %vm521
      %v523 = vsel %vm522, %v514, %v519
      %v524 = vrsqrt.pop %v472
      %v525 = vmul.f32 %v524, %v472
      %v526 = vmul.f32 %v525, %v524
      %v527 = vmul.f32 0.5, %v526
      %v528 = vsub.f32 1.5, %v527
      %v529 = vmul.f32 %v524, %v528
      %vm530 = vweird.f32 %v472
      %vm531 = vweird.f32 %v524
      %vm532 = vmor %vm530, %vm531
      %v533 = vsel %vm532, %v524, %v529
      %v534 = vrsqrt.pop %v473
      %v535 = vmul.f32 %v534, %v473
      %v536 = vmul.f32 %v535, %v534
      %v537 = vmul.f32 0.5, %v536
      %v538 = vsub.f32 1.5, %v537
      %v539 = vmul.f32 %v534, %v538
      %vm540 = vweird.f32 %v473
      %vm541 = vweird.f32 %v534
      %vm542 = vmor %vm540, %vm541
      %v543 = vsel %vm542, %v534, %v539
      %v544 = vrsqrt.pop %v474
      %v545 = vmul.f32 %v544, %v474
      %v546 = vmul.f32 %v545, %v544
      %v547 = vmul.f32 0.5, %v546
      %v548 = vsub.f32 1.5, %v547
      %v549 = vmul.f32 %v544, %v548
      %vm550 = vweird.f32 %v474
      %vm551 = vweird.f32 %v544
      %vm552 = vmor %vm550, %vm551
      %v553 = vsel %vm552, %v544, %v549
      %v554 = vrsqrt.pop %v475
      %v555 = vmul.f32 %v554, %v475
      %v556 = vmul.f32 %v555, %v554
      %v557 = vmul.f32 0.5, %v556
      %v558 = vsub.f32 1.5, %v557
      %v559 = vmul.f32 %v554, %v558
      %vm560 = vweird.f32 %v475
      %vm561 = vweird.f32 %v554
      %vm562 = vmor %vm560, %vm561
      %v563 = vsel %vm562, %v554, %v559
      %v564 = vrsqrt.pop %v476
      %v565 = vmul.f32 %v564, %v476
      %v566 = vmul.f32 %v565, %v564
      %v567 = vmul.f32 0.5, %v566
      %v568 = vsub.f32 1.5, %v567
      %v569 = vmul.f32 %v564, %v568
      %vm570 = vweird.f32 %v476
      %vm571 = vweird.f32 %v564
      %vm572 = vmor %vm570, %vm571
      %v573 = vsel %vm572, %v564, %v569
      %v574 = vrsqrt.pop %v477
      %v575 = vmul.f32 %v574, %v477
      %v576 = vmul.f32 %v575, %v574
      %v577 = vmul.f32 0.5, %v576
      %v578 = vsub.f32 1.5, %v577
      %v579 = vmul.f32 %v574, %v578
      %vm580 = vweird.f32 %v477
      %vm581 = vweird.f32 %v574
      %vm582 = vmor %vm580, %vm581
      %v583 = vsel %vm582, %v574, %v579
      %v584 = vrsqrt.pop %v478
      %v585 = vmul.f32 %v584, %v478
      %v586 = vmul.f32 %v585, %v584
      %v587 = vmul.f32 0.5, %v586
      %v588 = vsub.f32 1.5, %v587
      %v589 = vmul.f32 %v584, %v588
      %vm590 = vweird.f32 %v478
      %vm591 = vweird.f32 %v584
      %vm592 = vmor %vm590, %vm591
      %v593 = vsel %vm592, %v584, %v589
      %v594 = vrsqrt.pop %v479
      %v595 = vmul.f32 %v594, %v479
      %v596 = vmul.f32 %v595, %v594
      %v597 = vmul.f32 0.5, %v596
      %v598 = vsub.f32 1.5, %v597
      %v599 = vmul.f32 %v594, %v598
      %vm600 = vweird.f32 %v479
      %vm601 = vweird.f32 %v594
      %vm602 = vmor %vm600, %vm601
      %v603 = vsel %vm602, %v594, %v599
      %v604 = vrsqrt.pop %v480
      %v605 = vmul.f32 %v604, %v480
      %v606 = vmul.f32 %v605, %v604
      %v607 = vmul.f32 0.5, %v606
      %v608 = vsub.f32 1.5, %v607
      %v609 = vmul.f32 %v604, %v608
      %vm610 = vweird.f32 %v480
      %vm611 = vweird.f32 %v604
      %vm612 = vmor %vm610, %vm611
      %v613 = vsel %vm612, %v604, %v609
      %v614 = vrsqrt.pop %v481
      %v615 = vmul.f32 %v614, %v481
      %v616 = vmul.f32 %v615, %v614
      %v617 = vmul.f32 0.5, %v616
      %v618 = vsub.f32 1.5, %v617
      %v619 = vmul.f32 %v614, %v618
      %vm620 = vweird.f32 %v481
      %vm621 = vweird.f32 %v614
      %vm622 = vmor %vm620, %vm621
      %v623 = vsel %vm622, %v614, %v619
      %v624 = vrsqrt.pop %v482
      %v625 = vmul.f32 %v624, %v482
      %v626 = vmul.f32 %v625, %v624
      %v627 = vmul.f32 0.5, %v626
      %v628 = vsub.f32 1.5, %v627
      %v629 = vmul.f32 %v624, %v628
      %vm630 = vweird.f32 %v482
      %vm631 = vweird.f32 %v624
      %vm632 = vmor %vm630, %vm631
      %v633 = vsel %vm632, %v624, %v629
      %v634 = vrsqrt.pop %v483
      %v635 = vmul.f32 %v634, %v483
      %v636 = vmul.f32 %v635, %v634
      %v637 = vmul.f32 0.5, %v636
      %v638 = vsub.f32 1.5, %v637
      %v639 = vmul.f32 %v634, %v638
      %vm640 = vweird.f32 %v483
      %vm641 = vweird.f32 %v634
      %vm642 = vmor %vm640, %vm641
      %v643 = vsel %vm642, %v634, %v639
      %v644 = vmul.f32 %v372, %v493
      %v645 = vmul.f32 %v373, %v503
      %v646 = vmul.f32 %v374, %v513
      %v647 = vmul.f32 %v375, %v523
      %v648 = vmul.f32 %v376, %v533
      %v649 = vmul.f32 %v377, %v543
      %v650 = vmul.f32 %v378, %v553
      %v651 = vmul.f32 %v379, %v563
      %v652 = vmul.f32 %v380, %v573
      %v653 = vmul.f32 %v381, %v583
      %v654 = vmul.f32 %v382, %v593
      %v655 = vmul.f32 %v383, %v603
      %v656 = vmul.f32 %v384, %v613
      %v657 = vmul.f32 %v385, %v623
      %v658 = vmul.f32 %v386, %v633
      %v659 = vmul.f32 %v387, %v643
      %v660 = vld [vmem:[%s1] sm:$0x1]
      %v662 = vperm.slane %v660, 0
      %v664 = vmul.f32 %v644, %v662
      %v665 = vmul.f32 %v645, %v662
      %v666 = vmul.f32 %v646, %v662
      %v667 = vmul.f32 %v647, %v662
      %v668 = vmul.f32 %v648, %v662
      %v669 = vmul.f32 %v649, %v662
      %v670 = vmul.f32 %v650, %v662
      %v671 = vmul.f32 %v651, %v662
      %v672 = vmul.f32 %v652, %v662
      %v673 = vmul.f32 %v653, %v662
      %v674 = vmul.f32 %v654, %v662
      %v675 = vmul.f32 %v655, %v662
      %v676 = vmul.f32 %v656, %v662
      %v677 = vmul.f32 %v657, %v662
      %v678 = vmul.f32 %v658, %v662
      %v679 = vmul.f32 %v659, %v662
      %v680 = vld [vmem:[%s2] sm:$0x1]
      %v682 = vperm.slane %v680, 0
      %v684 = vadd.f32 %v664, %v682
      %v685 = vadd.f32 %v665, %v682
      %v686 = vadd.f32 %v666, %v682
      %v687 = vadd.f32 %v667, %v682
      %v688 = vadd.f32 %v668, %v682
      %v689 = vadd.f32 %v669, %v682
      %v690 = vadd.f32 %v670, %v682
      %v691 = vadd.f32 %v671, %v682
      %v692 = vadd.f32 %v672, %v682
      %v693 = vadd.f32 %v673, %v682
      %v694 = vadd.f32 %v674, %v682
      %v695 = vadd.f32 %v675, %v682
      %v696 = vadd.f32 %v676, %v682
      %v697 = vadd.f32 %v677, %v682
      %v698 = vadd.f32 %v678, %v682
      %v699 = vadd.f32 %v679, %v682
      %v700 = vld [vmem:[%s3] sm:$0xff]
      %v701 = vld [vmem:[%s3 + $0x8] sm:$0xff]
      %v702 = vld [vmem:[%s3 + $0x10] sm:$0xff]
      %v703 = vld [vmem:[%s3 + $0x18] sm:$0xff]
      %v705 = vsel %vm299, %v684, 0
      %v708 = vsel %vm299, %v685, 0
      %710 = vmatpush.msra.mxu0 0.0
      %711 = vmatpush.msra.mxu0 0.0
      %712 = vmatpush.msra.mxu0 0.0
      %713 = vmatpush.msra.mxu0 0.0
      %714 = vmatpush.msra.mxu0 0.0
      %715 = vmatpush.msra.mxu0 0.0
      %716 = vmatpush.msra.mxu0 0.0
      %717 = vmatpush.msra.mxu0 0.0
      %718 = vmatpush.msra.mxu0 0.0
      %719 = vmatpush.msra.mxu0 0.0
      %720 = vmatpush.msra.mxu0 0.0
      %721 = vmatpush.msra.mxu0 0.0
      %722 = vmatpush.msra.mxu0 %v703
      %723 = vmatpush.msra.mxu0 %v702
      %724 = vmatpush.msra.mxu0 %v701
      %725 = vmatpush.msra.mxu0 %v700
      %726 = vmatmul.f32.gmra.mxu0 %v705
      %v727 = vpop.f32.mrf.mxu0
      %v728 = vadd.f32 0.0, %v727
      %729 = vmatmul.f32.gmra.mxu0 %v708
      %v730 = vpop.f32.mrf.mxu0
      %v731 = vadd.f32 0.0, %v730
      %732 = vdwg.mxu0
      %v734 = vsel %vm299, %v686, 0
      %v737 = vsel %vm299, %v687, 0
      %739 = vmatpush.msra.mxu0 0.0
      %740 = vmatpush.msra.mxu0 0.0
      %741 = vmatpush.msra.mxu0 0.0
      %742 = vmatpush.msra.mxu0 0.0
      %743 = vmatpush.msra.mxu0 0.0
      %744 = vmatpush.msra.mxu0 0.0
      %745 = vmatpush.msra.mxu0 0.0
      %746 = vmatpush.msra.mxu0 0.0
      %747 = vmatpush.msra.mxu0 0.0
      %748 = vmatpush.msra.mxu0 0.0
      %749 = vmatpush.msra.mxu0 0.0
      %750 = vmatpush.msra.mxu0 0.0
      %751 = vmatpush.msra.mxu0 %v703
      %752 = vmatpush.msra.mxu0 %v702
      %753 = vmatpush.msra.mxu0 %v701
      %754 = vmatpush.msra.mxu0 %v700
      %755 = vmatmul.f32.gmra.mxu0 %v734
      %v756 = vpop.f32.mrf.mxu0
      %v757 = vadd.f32 0.0, %v756
      %758 = vmatmul.f32.gmra.mxu0 %v737
      %v759 = vpop.f32.mrf.mxu0
      %v760 = vadd.f32 0.0, %v759
      %761 = vdwg.mxu0
      %v763 = vsel %vm299, %v688, 0
      %v766 = vsel %vm299, %v689, 0
      %768 = vmatpush.msra.mxu0 0.0
      %769 = vmatpush.msra.mxu0 0.0
      %770 = vmatpush.msra.mxu0 0.0
      %771 = vmatpush.msra.mxu0 0.0
      %772 = vmatpush.msra.mxu0 0.0
      %773 = vmatpush.msra.mxu0 0.0
      %774 = vmatpush.msra.mxu0 0.0
      %775 = vmatpush.msra.mxu0 0.0
      %776 = vmatpush.msra.mxu0 0.0
      %777 = vmatpush.msra.mxu0 0.0
      %778 = vmatpush.msra.mxu0 0.0
      %779 = vmatpush.msra.mxu0 0.0
      %780 = vmatpush.msra.mxu0 %v703
      %781 = vmatpush.msra.mxu0 %v702
      %782 = vmatpush.msra.mxu0 %v701
      %783 = vmatpush.msra.mxu0 %v700
      %784 = vmatmul.f32.gmra.mxu0 %v763
      %v785 = vpop.f32.mrf.mxu0
      %v786 = vadd.f32 0.0, %v785
      %787 = vmatmul.f32.gmra.mxu0 %v766
      %v788 = vpop.f32.mrf.mxu0
      %v789 = vadd.f32 0.0, %v788
      %790 = vdwg.mxu0
      %v792 = vsel %vm299, %v690, 0
      %v795 = vsel %vm299, %v691, 0
      %797 = vmatpush.msra.mxu0 0.0
      %798 = vmatpush.msra.mxu0 0.0
      %799 = vmatpush.msra.mxu0 0.0
      %800 = vmatpush.msra.mxu0 0.0
      %801 = vmatpush.msra.mxu0 0.0
      %802 = vmatpush.msra.mxu0 0.0
      %803 = vmatpush.msra.mxu0 0.0
      %804 = vmatpush.msra.mxu0 0.0
      %805 = vmatpush.msra.mxu0 0.0
      %806 = vmatpush.msra.mxu0 0.0
      %807 = vmatpush.msra.mxu0 0.0
      %808 = vmatpush.msra.mxu0 0.0
      %809 = vmatpush.msra.mxu0 %v703
      %810 = vmatpush.msra.mxu0 %v702
      %811 = vmatpush.msra.mxu0 %v701
      %812 = vmatpush.msra.mxu0 %v700
      %813 = vmatmul.f32.gmra.mxu0 %v792
      %v814 = vpop.f32.mrf.mxu0
      %v815 = vadd.f32 0.0, %v814
      %816 = vmatmul.f32.gmra.mxu0 %v795
      %v817 = vpop.f32.mrf.mxu0
      %v818 = vadd.f32 0.0, %v817
      %819 = vdwg.mxu0
      %v821 = vsel %vm299, %v692, 0
      %v824 = vsel %vm299, %v693, 0
      %826 = vmatpush.msra.mxu0 0.0
      %827 = vmatpush.msra.mxu0 0.0
      %828 = vmatpush.msra.mxu0 0.0
      %829 = vmatpush.msra.mxu0 0.0
      %830 = vmatpush.msra.mxu0 0.0
      %831 = vmatpush.msra.mxu0 0.0
      %832 = vmatpush.msra.mxu0 0.0
      %833 = vmatpush.msra.mxu0 0.0
      %834 = vmatpush.msra.mxu0 0.0
      %835 = vmatpush.msra.mxu0 0.0
      %836 = vmatpush.msra.mxu0 0.0
      %837 = vmatpush.msra.mxu0 0.0
      %838 = vmatpush.msra.mxu0 %v703
      %839 = vmatpush.msra.mxu0 %v702
      %840 = vmatpush.msra.mxu0 %v701
      %841 = vmatpush.msra.mxu0 %v700
      %842 = vmatmul.f32.gmra.mxu0 %v821
      %v843 = vpop.f32.mrf.mxu0
      %v844 = vadd.f32 0.0, %v843
      %845 = vmatmul.f32.gmra.mxu0 %v824
      %v846 = vpop.f32.mrf.mxu0
      %v847 = vadd.f32 0.0, %v846
      %848 = vdwg.mxu0
      %v850 = vsel %vm299, %v694, 0
      %v853 = vsel %vm299, %v695, 0
      %855 = vmatpush.msra.mxu0 0.0
      %856 = vmatpush.msra.mxu0 0.0
      %857 = vmatpush.msra.mxu0 0.0
      %858 = vmatpush.msra.mxu0 0.0
      %859 = vmatpush.msra.mxu0 0.0
      %860 = vmatpush.msra.mxu0 0.0
      %861 = vmatpush.msra.mxu0 0.0
      %862 = vmatpush.msra.mxu0 0.0
      %863 = vmatpush.msra.mxu0 0.0
      %864 = vmatpush.msra.mxu0 0.0
      %865 = vmatpush.msra.mxu0 0.0
      %866 = vmatpush.msra.mxu0 0.0
      %867 = vmatpush.msra.mxu0 %v703
      %868 = vmatpush.msra.mxu0 %v702
      %869 = vmatpush.msra.mxu0 %v701
      %870 = vmatpush.msra.mxu0 %v700
      %871 = vmatmul.f32.gmra.mxu0 %v850
      %v872 = vpop.f32.mrf.mxu0
      %v873 = vadd.f32 0.0, %v872
      %874 = vmatmul.f32.gmra.mxu0 %v853
      %v875 = vpop.f32.mrf.mxu0
      %v876 = vadd.f32 0.0, %v875
      %877 = vdwg.mxu0
      %v879 = vsel %vm299, %v696, 0
      %v882 = vsel %vm299, %v697, 0
      %884 = vmatpush.msra.mxu0 0.0
      %885 = vmatpush.msra.mxu0 0.0
      %886 = vmatpush.msra.mxu0 0.0
      %887 = vmatpush.msra.mxu0 0.0
      %888 = vmatpush.msra.mxu0 0.0
      %889 = vmatpush.msra.mxu0 0.0
      %890 = vmatpush.msra.mxu0 0.0
      %891 = vmatpush.msra.mxu0 0.0
      %892 = vmatpush.msra.mxu0 0.0
      %893 = vmatpush.msra.mxu0 0.0
      %894 = vmatpush.msra.mxu0 0.0
      %895 = vmatpush.msra.mxu0 0.0
      %896 = vmatpush.msra.mxu0 %v703
      %897 = vmatpush.msra.mxu0 %v702
      %898 = vmatpush.msra.mxu0 %v701
      %899 = vmatpush.msra.mxu0 %v700
      %900 = vmatmul.f32.gmra.mxu0 %v879
      %v901 = vpop.f32.mrf.mxu0
      %v902 = vadd.f32 0.0, %v901
      %903 = vmatmul.f32.gmra.mxu0 %v882
      %v904 = vpop.f32.mrf.mxu0
      %v905 = vadd.f32 0.0, %v904
      %906 = vdwg.mxu0
      %v908 = vsel %vm299, %v698, 0
      %v911 = vsel %vm299, %v699, 0
      %913 = vmatpush.msra.mxu0 0.0
      %914 = vmatpush.msra.mxu0 0.0
      %915 = vmatpush.msra.mxu0 0.0
      %916 = vmatpush.msra.mxu0 0.0
      %917 = vmatpush.msra.mxu0 0.0
      %918 = vmatpush.msra.mxu0 0.0
      %919 = vmatpush.msra.mxu0 0.0
      %920 = vmatpush.msra.mxu0 0.0
      %921 = vmatpush.msra.mxu0 0.0
      %922 = vmatpush.msra.mxu0 0.0
      %923 = vmatpush.msra.mxu0 0.0
      %924 = vmatpush.msra.mxu0 0.0
      %925 = vmatpush.msra.mxu0 %v703
      %926 = vmatpush.msra.mxu0 %v702
      %927 = vmatpush.msra.mxu0 %v701
      %928 = vmatpush.msra.mxu0 %v700
      %929 = vmatmul.f32.gmra.mxu0 %v908
      %v930 = vpop.f32.mrf.mxu0
      %v931 = vadd.f32 0.0, %v930
      %932 = vmatmul.f32.gmra.mxu0 %v911
      %v933 = vpop.f32.mrf.mxu0
      %v934 = vadd.f32 0.0, %v933
      %935 = vdwg.mxu0
      %v936 = vld [vmem:[%s4] sm:$0x1]
      %v938 = vperm.slane %v936, 0
      %v940 = vadd.f32 %v728, %v938
      %v941 = vadd.f32 %v731, %v938
      %v942 = vadd.f32 %v757, %v938
      %v943 = vadd.f32 %v760, %v938
      %v944 = vadd.f32 %v786, %v938
      %v945 = vadd.f32 %v789, %v938
      %v946 = vadd.f32 %v815, %v938
      %v947 = vadd.f32 %v818, %v938
      %v948 = vadd.f32 %v844, %v938
      %v949 = vadd.f32 %v847, %v938
      %v950 = vadd.f32 %v873, %v938
      %v951 = vadd.f32 %v876, %v938
      %v952 = vadd.f32 %v902, %v938
      %v953 = vadd.f32 %v905, %v938
      %v954 = vadd.f32 %v931, %v938
      %v955 = vadd.f32 %v934, %v938
      %v956 = vld [vmem:[%s5] sm:$0x3f]
      %vm957 = vcmask 130048
      %v959 = vsel %vm957, %v728, 0
      %v962 = vsel %vm957, %v956, 0
      %964 = vmatpush.xpose.msra.mxu0 0.0
      %965 = vmatpush.xpose.msra.mxu0 0.0
      %966 = vmatpush.xpose.msra.mxu0 0.0
      %967 = vmatpush.xpose.msra.mxu0 0.0
      %968 = vmatpush.xpose.msra.mxu0 0.0
      %969 = vmatpush.xpose.msra.mxu0 0.0
      %970 = vmatpush.xpose.msra.mxu0 0.0
      %971 = vmatpush.xpose.msra.mxu0 0.0
      %972 = vmatpush.xpose.msra.mxu0 0.0
      %973 = vmatpush.xpose.msra.mxu0 0.0
      %974 = vmatpush.xpose.msra.mxu0 0.0
      %975 = vmatpush.xpose.msra.mxu0 0.0
      %976 = vmatpush.xpose.msra.mxu0 0.0
      %977 = vmatpush.xpose.msra.mxu0 0.0
      %978 = vmatpush.xpose.msra.mxu0 0.0
      %979 = vmatpush.xpose.msra.mxu0 %v962
      %980 = vmatmul.f32.gmra.mxu0 %v959
      %v981 = vpop.f32.mrf.mxu0
      %v982 = vadd.f32 0.0, %v981
      %983 = vdwg.mxu0
      %v985 = vsel %vm957, %v757, 0
      %987 = vmatpush.xpose.msra.mxu0 0.0
      %988 = vmatpush.xpose.msra.mxu0 0.0
      %989 = vmatpush.xpose.msra.mxu0 0.0
      %990 = vmatpush.xpose.msra.mxu0 0.0
      %991 = vmatpush.xpose.msra.mxu0 0.0
      %992 = vmatpush.xpose.msra.mxu0 0.0
      %993 = vmatpush.xpose.msra.mxu0 0.0
      %994 = vmatpush.xpose.msra.mxu0 0.0
      %995 = vmatpush.xpose.msra.mxu0 0.0
      %996 = vmatpush.xpose.msra.mxu0 0.0
      %997 = vmatpush.xpose.msra.mxu0 0.0
      %998 = vmatpush.xpose.msra.mxu0 0.0
      %999 = vmatpush.xpose.msra.mxu0 0.0
      %1000 = vmatpush.xpose.msra.mxu0 0.0
      %1001 = vmatpush.xpose.msra.mxu0 0.0
      %1002 = vmatpush.xpose.msra.mxu0 %v962
      %1003 = vmatmul.f32.gmra.mxu0 %v985
      %v1004 = vpop.f32.mrf.mxu0
      %v1005 = vadd.f32 0.0, %v1004
      %1006 = vdwg.mxu0
      %v1008 = vsel %vm957, %v786, 0
      %1010 = vmatpush.xpose.msra.mxu0 0.0
      %1011 = vmatpush.xpose.msra.mxu0 0.0
      %1012 = vmatpush.xpose.msra.mxu0 0.0
      %1013 = vmatpush.xpose.msra.mxu0 0.0
      %1014 = vmatpush.xpose.msra.mxu0 0.0
      %1015 = vmatpush.xpose.msra.mxu0 0.0
      %1016 = vmatpush.xpose.msra.mxu0 0.0
      %1017 = vmatpush.xpose.msra.mxu0 0.0
      %1018 = vmatpush.xpose.msra.mxu0 0.0
      %1019 = vmatpush.xpose.msra.mxu0 0.0
      %1020 = vmatpush.xpose.msra.mxu0 0.0
      %1021 = vmatpush.xpose.msra.mxu0 0.0
      %1022 = vmatpush.xpose.msra.mxu0 0.0
      %1023 = vmatpush.xpose.msra.mxu0 0.0
      %1024 = vmatpush.xpose.msra.mxu0 0.0
      %1025 = vmatpush.xpose.msra.mxu0 %v962
      %1026 = vmatmul.f32.gmra.mxu0 %v1008
      %v1027 = vpop.f32.mrf.mxu0
      %v1028 = vadd.f32 0.0, %v1027
      %1029 = vdwg.mxu0
      %v1031 = vsel %vm957, %v815, 0
      %1033 = vmatpush.xpose.msra.mxu0 0.0
      %1034 = vmatpush.xpose.msra.mxu0 0.0
      %1035 = vmatpush.xpose.msra.mxu0 0.0
      %1036 = vmatpush.xpose.msra.mxu0 0.0
      %1037 = vmatpush.xpose.msra.mxu0 0.0
      %1038 = vmatpush.xpose.msra.mxu0 0.0
      %1039 = vmatpush.xpose.msra.mxu0 0.0
      %1040 = vmatpush.xpose.msra.mxu0 0.0
      %1041 = vmatpush.xpose.msra.mxu0 0.0
      %1042 = vmatpush.xpose.msra.mxu0 0.0
      %1043 = vmatpush.xpose.msra.mxu0 0.0
      %1044 = vmatpush.xpose.msra.mxu0 0.0
      %1045 = vmatpush.xpose.msra.mxu0 0.0
      %1046 = vmatpush.xpose.msra.mxu0 0.0
      %1047 = vmatpush.xpose.msra.mxu0 0.0
      %1048 = vmatpush.xpose.msra.mxu0 %v962
      %1049 = vmatmul.f32.gmra.mxu0 %v1031
      %v1050 = vpop.f32.mrf.mxu0
      %v1051 = vadd.f32 0.0, %v1050
      %1052 = vdwg.mxu0
      %v1054 = vsel %vm957, %v844, 0
      %1056 = vmatpush.xpose.msra.mxu0 0.0
      %1057 = vmatpush.xpose.msra.mxu0 0.0
      %1058 = vmatpush.xpose.msra.mxu0 0.0
      %1059 = vmatpush.xpose.msra.mxu0 0.0
      %1060 = vmatpush.xpose.msra.mxu0 0.0
      %1061 = vmatpush.xpose.msra.mxu0 0.0
      %1062 = vmatpush.xpose.msra.mxu0 0.0
      %1063 = vmatpush.xpose.msra.mxu0 0.0
      %1064 = vmatpush.xpose.msra.mxu0 0.0
      %1065 = vmatpush.xpose.msra.mxu0 0.0
      %1066 = vmatpush.xpose.msra.mxu0 0.0
      %1067 = vmatpush.xpose.msra.mxu0 0.0
      %1068 = vmatpush.xpose.msra.mxu0 0.0
      %1069 = vmatpush.xpose.msra.mxu0 0.0
      %1070 = vmatpush.xpose.msra.mxu0 0.0
      %1071 = vmatpush.xpose.msra.mxu0 %v962
      %1072 = vmatmul.f32.gmra.mxu0 %v1054
      %v1073 = vpop.f32.mrf.mxu0
      %v1074 = vadd.f32 0.0, %v1073
      %1075 = vdwg.mxu0
      %v1077 = vsel %vm957, %v873, 0
      %1079 = vmatpush.xpose.msra.mxu0 0.0
      %1080 = vmatpush.xpose.msra.mxu0 0.0
      %1081 = vmatpush.xpose.msra.mxu0 0.0
      %1082 = vmatpush.xpose.msra.mxu0 0.0
      %1083 = vmatpush.xpose.msra.mxu0 0.0
      %1084 = vmatpush.xpose.msra.mxu0 0.0
      %1085 = vmatpush.xpose.msra.mxu0 0.0
      %1086 = vmatpush.xpose.msra.mxu0 0.0
      %1087 = vmatpush.xpose.msra.mxu0 0.0
      %1088 = vmatpush.xpose.msra.mxu0 0.0
      %1089 = vmatpush.xpose.msra.mxu0 0.0
      %1090 = vmatpush.xpose.msra.mxu0 0.0
      %1091 = vmatpush.xpose.msra.mxu0 0.0
      %1092 = vmatpush.xpose.msra.mxu0 0.0
      %1093 = vmatpush.xpose.msra.mxu0 0.0
      %1094 = vmatpush.xpose.msra.mxu0 %v962
      %1095 = vmatmul.f32.gmra.mxu0 %v1077
      %v1096 = vpop.f32.mrf.mxu0
      %v1097 = vadd.f32 0.0, %v1096
      %1098 = vdwg.mxu0
      %v1100 = vsel %vm957, %v902, 0
      %1102 = vmatpush.xpose.msra.mxu0 0.0
      %1103 = vmatpush.xpose.msra.mxu0 0.0
      %1104 = vmatpush.xpose.msra.mxu0 0.0
      %1105 = vmatpush.xpose.msra.mxu0 0.0
      %1106 = vmatpush.xpose.msra.mxu0 0.0
      %1107 = vmatpush.xpose.msra.mxu0 0.0
      %1108 = vmatpush.xpose.msra.mxu0 0.0
      %1109 = vmatpush.xpose.msra.mxu0 0.0
      %1110 = vmatpush.xpose.msra.mxu0 0.0
      %1111 = vmatpush.xpose.msra.mxu0 0.0
      %1112 = vmatpush.xpose.msra.mxu0 0.0
      %1113 = vmatpush.xpose.msra.mxu0 0.0
      %1114 = vmatpush.xpose.msra.mxu0 0.0
      %1115 = vmatpush.xpose.msra.mxu0 0.0
      %1116 = vmatpush.xpose.msra.mxu0 0.0
      %1117 = vmatpush.xpose.msra.mxu0 %v962
      %1118 = vmatmul.f32.gmra.mxu0 %v1100
      %v1119 = vpop.f32.mrf.mxu0
      %v1120 = vadd.f32 0.0, %v1119
      %1121 = vdwg.mxu0
      %v1123 = vsel %vm957, %v931, 0
      %1125 = vmatpush.xpose.msra.mxu0 0.0
      %1126 = vmatpush.xpose.msra.mxu0 0.0
      %1127 = vmatpush.xpose.msra.mxu0 0.0
      %1128 = vmatpush.xpose.msra.mxu0 0.0
      %1129 = vmatpush.xpose.msra.mxu0 0.0
      %1130 = vmatpush.xpose.msra.mxu0 0.0
      %1131 = vmatpush.xpose.msra.mxu0 0.0
      %1132 = vmatpush.xpose.msra.mxu0 0.0
      %1133 = vmatpush.xpose.msra.mxu0 0.0
      %1134 = vmatpush.xpose.msra.mxu0 0.0
      %1135 = vmatpush.xpose.msra.mxu0 0.0
      %1136 = vmatpush.xpose.msra.mxu0 0.0
      %1137 = vmatpush.xpose.msra.mxu0 0.0
      %1138 = vmatpush.xpose.msra.mxu0 0.0
      %1139 = vmatpush.xpose.msra.mxu0 0.0
      %1140 = vmatpush.xpose.msra.mxu0 %v962
      %1141 = vmatmul.f32.gmra.mxu0 %v1123
      %v1142 = vpop.f32.mrf.mxu0
      %v1143 = vadd.f32 0.0, %v1142
      %1144 = vdwg.mxu0
      %vm1145 = vcmask 40960
      %v1146 = vsel %vm1145, %v982, -inf
      %1147 = vmax.xlane.f32.xlu0 %v1146
      %v1148 = vpop.xlane.xlu0 %1147
      %v1149 = vsel %vm1145, %v1005, -inf
      %1150 = vmax.xlane.f32.xlu0 %v1149
      %v1151 = vpop.xlane.xlu0 %1150
      %v1152 = vsel %vm1145, %v1028, -inf
      %1153 = vmax.xlane.f32.xlu0 %v1152
      %v1154 = vpop.xlane.xlu0 %1153
      %v1155 = vsel %vm1145, %v1051, -inf
      %1156 = vmax.xlane.f32.xlu0 %v1155
      %v1157 = vpop.xlane.xlu0 %1156
      %v1158 = vsel %vm1145, %v1074, -inf
      %1159 = vmax.xlane.f32.xlu0 %v1158
      %v1160 = vpop.xlane.xlu0 %1159
      %v1161 = vsel %vm1145, %v1097, -inf
      %1162 = vmax.xlane.f32.xlu0 %v1161
      %v1163 = vpop.xlane.xlu0 %1162
      %v1164 = vsel %vm1145, %v1120, -inf
      %1165 = vmax.xlane.f32.xlu0 %v1164
      %v1166 = vpop.xlane.xlu0 %1165
      %v1167 = vsel %vm1145, %v1143, -inf
      %1168 = vmax.xlane.f32.xlu0 %v1167
      %v1169 = vpop.xlane.xlu0 %1168
      %v1170 = vsub.f32 %v982, %v1148
      %v1171 = vsub.f32 %v1005, %v1151
      %v1172 = vsub.f32 %v1028, %v1154
      %v1173 = vsub.f32 %v1051, %v1157
      %v1174 = vsub.f32 %v1074, %v1160
      %v1175 = vsub.f32 %v1097, %v1163
      %v1176 = vsub.f32 %v1120, %v1166
      %v1177 = vsub.f32 %v1143, %v1169
      %v1178 = vmul.f32 %v1170, 1.442695
      %v1179 = vpow.pop %v1178
      %v1180 = vmul.f32 %v1171, 1.442695
      %v1181 = vpow.pop %v1180
      %v1182 = vmul.f32 %v1172, 1.442695
      %v1183 = vpow.pop %v1182
      %v1184 = vmul.f32 %v1173, 1.442695
      %v1185 = vpow.pop %v1184
      %v1186 = vmul.f32 %v1174, 1.442695
      %v1187 = vpow.pop %v1186
      %v1188 = vmul.f32 %v1175, 1.442695
      %v1189 = vpow.pop %v1188
      %v1190 = vmul.f32 %v1176, 1.442695
      %v1191 = vpow.pop %v1190
      %v1192 = vmul.f32 %v1177, 1.442695
      %v1193 = vpow.pop %v1192
      %v1194 = vsel %vm1145, %v1179, 0.0
      %1195 = vadd.xlane.f32.xlu0 %v1194
      %v1196 = vpop.xlane.xlu0 %1195
      %v1197 = vsel %vm1145, %v1181, 0.0
      %1198 = vadd.xlane.f32.xlu0 %v1197
      %v1199 = vpop.xlane.xlu0 %1198
      %v1200 = vsel %vm1145, %v1183, 0.0
      %1201 = vadd.xlane.f32.xlu0 %v1200
      %v1202 = vpop.xlane.xlu0 %1201
      %v1203 = vsel %vm1145, %v1185, 0.0
      %1204 = vadd.xlane.f32.xlu0 %v1203
      %v1205 = vpop.xlane.xlu0 %1204
      %v1206 = vsel %vm1145, %v1187, 0.0
      %1207 = vadd.xlane.f32.xlu0 %v1206
      %v1208 = vpop.xlane.xlu0 %1207
      %v1209 = vsel %vm1145, %v1189, 0.0
      %1210 = vadd.xlane.f32.xlu0 %v1209
      %v1211 = vpop.xlane.xlu0 %1210
      %v1212 = vsel %vm1145, %v1191, 0.0
      %1213 = vadd.xlane.f32.xlu0 %v1212
      %v1214 = vpop.xlane.xlu0 %1213
      %v1215 = vsel %vm1145, %v1193, 0.0
      %1216 = vadd.xlane.f32.xlu0 %v1215
      %v1217 = vpop.xlane.xlu0 %1216
      %v1218 = vrcp.pop %v1196
      %v1219 = vmul.f32 %v1196, %v1218
      %v1220 = vsub.f32 1.0, %v1219
      %v1221 = vmul.f32 %v1218, %v1220
      %v1222 = vadd.f32 %v1218, %v1221
      %vm1223 = vweird.f32 %v1196
      %vm1224 = vweird.f32 %v1218
      %vm1225 = vmor %vm1223, %vm1224
      %v1226 = vsel %vm1225, %v1218, %v1222
      %v1227 = vand.u32 2147483647, %v1196
      %vm1228 = vcmp.eq.f32.partialorder %v1227, 8.507059e+37
      %v1229 = vand.u32 %v1196, 2147483648
      %v1230 = vor.u32 1.1754944e-38, %v1229
      %v1231 = vsel %vm1228, %v1230, %v1226
      %v1232 = vmul.f32 %v1179, %v1231
      %v1233 = vrcp.pop %v1199
      %v1234 = vmul.f32 %v1199, %v1233
      %v1235 = vsub.f32 1.0, %v1234
      %v1236 = vmul.f32 %v1233, %v1235
      %v1237 = vadd.f32 %v1233, %v1236
      %vm1238 = vweird.f32 %v1199
      %vm1239 = vweird.f32 %v1233
      %vm1240 = vmor %vm1238, %vm1239
      %v1241 = vsel %vm1240, %v1233, %v1237
      %v1242 = vand.u32 2147483647, %v1199
      %vm1243 = vcmp.eq.f32.partialorder %v1242, 8.507059e+37
      %v1244 = vand.u32 %v1199, 2147483648
      %v1245 = vor.u32 1.1754944e-38, %v1244
      %v1246 = vsel %vm1243, %v1245, %v1241
      %v1247 = vmul.f32 %v1181, %v1246
      %v1248 = vrcp.pop %v1202
      %v1249 = vmul.f32 %v1202, %v1248
      %v1250 = vsub.f32 1.0, %v1249
      %v1251 = vmul.f32 %v1248, %v1250
      %v1252 = vadd.f32 %v1248, %v1251
      %vm1253 = vweird.f32 %v1202
      %vm1254 = vweird.f32 %v1248
      %vm1255 = vmor %vm1253, %vm1254
      %v1256 = vsel %vm1255, %v1248, %v1252
      %v1257 = vand.u32 2147483647, %v1202
      %vm1258 = vcmp.eq.f32.partialorder %v1257, 8.507059e+37
      %v1259 = vand.u32 %v1202, 2147483648
      %v1260 = vor.u32 1.1754944e-38, %v1259
      %v1261 = vsel %vm1258, %v1260, %v1256
      %v1262 = vmul.f32 %v1183, %v1261
      %v1263 = vrcp.pop %v1205
      %v1264 = vmul.f32 %v1205, %v1263
      %v1265 = vsub.f32 1.0, %v1264
      %v1266 = vmul.f32 %v1263, %v1265
      %v1267 = vadd.f32 %v1263, %v1266
      %vm1268 = vweird.f32 %v1205
      %vm1269 = vweird.f32 %v1263
      %vm1270 = vmor %vm1268, %vm1269
      %v1271 = vsel %vm1270, %v1263, %v1267
      %v1272 = vand.u32 2147483647, %v1205
      %vm1273 = vcmp.eq.f32.partialorder %v1272, 8.507059e+37
      %v1274 = vand.u32 %v1205, 2147483648
      %v1275 = vor.u32 1.1754944e-38, %v1274
      %v1276 = vsel %vm1273, %v1275, %v1271
      %v1277 = vmul.f32 %v1185, %v1276
      %v1278 = vrcp.pop %v1208
      %v1279 = vmul.f32 %v1208, %v1278
      %v1280 = vsub.f32 1.0, %v1279
      %v1281 = vmul.f32 %v1278, %v1280
      %v1282 = vadd.f32 %v1278, %v1281
      %vm1283 = vweird.f32 %v1208
      %vm1284 = vweird.f32 %v1278
      %vm1285 = vmor %vm1283, %vm1284
      %v1286 = vsel %vm1285, %v1278, %v1282
      %v1287 = vand.u32 2147483647, %v1208
      %vm1288 = vcmp.eq.f32.partialorder %v1287, 8.507059e+37
      %v1289 = vand.u32 %v1208, 2147483648
      %v1290 = vor.u32 1.1754944e-38, %v1289
      %v1291 = vsel %vm1288, %v1290, %v1286
      %v1292 = vmul.f32 %v1187, %v1291
      %v1293 = vrcp.pop %v1211
      %v1294 = vmul.f32 %v1211, %v1293
      %v1295 = vsub.f32 1.0, %v1294
      %v1296 = vmul.f32 %v1293, %v1295
      %v1297 = vadd.f32 %v1293, %v1296
      %vm1298 = vweird.f32 %v1211
      %vm1299 = vweird.f32 %v1293
      %vm1300 = vmor %vm1298, %vm1299
      %v1301 = vsel %vm1300, %v1293, %v1297
      %v1302 = vand.u32 2147483647, %v1211
      %vm1303 = vcmp.eq.f32.partialorder %v1302, 8.507059e+37
      %v1304 = vand.u32 %v1211, 2147483648
      %v1305 = vor.u32 1.1754944e-38, %v1304
      %v1306 = vsel %vm1303, %v1305, %v1301
      %v1307 = vmul.f32 %v1189, %v1306
      %v1308 = vrcp.pop %v1214
      %v1309 = vmul.f32 %v1214, %v1308
      %v1310 = vsub.f32 1.0, %v1309
      %v1311 = vmul.f32 %v1308, %v1310
      %v1312 = vadd.f32 %v1308, %v1311
      %vm1313 = vweird.f32 %v1214
      %vm1314 = vweird.f32 %v1308
      %vm1315 = vmor %vm1313, %vm1314
      %v1316 = vsel %vm1315, %v1308, %v1312
      %v1317 = vand.u32 2147483647, %v1214
      %vm1318 = vcmp.eq.f32.partialorder %v1317, 8.507059e+37
      %v1319 = vand.u32 %v1214, 2147483648
      %v1320 = vor.u32 1.1754944e-38, %v1319
      %v1321 = vsel %vm1318, %v1320, %v1316
      %v1322 = vmul.f32 %v1191, %v1321
      %v1323 = vrcp.pop %v1217
      %v1324 = vmul.f32 %v1217, %v1323
      %v1325 = vsub.f32 1.0, %v1324
      %v1326 = vmul.f32 %v1323, %v1325
      %v1327 = vadd.f32 %v1323, %v1326
      %vm1328 = vweird.f32 %v1217
      %vm1329 = vweird.f32 %v1323
      %vm1330 = vmor %vm1328, %vm1329
      %v1331 = vsel %vm1330, %v1323, %v1327
      %v1332 = vand.u32 2147483647, %v1217
      %vm1333 = vcmp.eq.f32.partialorder %v1332, 8.507059e+37
      %v1334 = vand.u32 %v1217, 2147483648
      %v1335 = vor.u32 1.1754944e-38, %v1334
      %v1336 = vsel %vm1333, %v1335, %v1331
      %v1337 = vmul.f32 %v1193, %v1336
      %vm1340 = vcmask 1046528
      %v1341 = vrot.slane %v940, 1
      %v1342 = vrot.slane %v941, 1
      %v1343 = vsel %vm1340, %v1341, %v1342
      %v1344 = vsel %vm957, %v1343, 0
      %1346 = vmatpush.xpose.msra.mxu0 0.0
      %1347 = vmatpush.xpose.msra.mxu0 0.0
      %1348 = vmatpush.xpose.msra.mxu0 0.0
      %1349 = vmatpush.xpose.msra.mxu0 0.0
      %1350 = vmatpush.xpose.msra.mxu0 0.0
      %1351 = vmatpush.xpose.msra.mxu0 0.0
      %1352 = vmatpush.xpose.msra.mxu0 0.0
      %1353 = vmatpush.xpose.msra.mxu0 0.0
      %1354 = vmatpush.xpose.msra.mxu0 0.0
      %1355 = vmatpush.xpose.msra.mxu0 0.0
      %1356 = vmatpush.xpose.msra.mxu0 0.0
      %1357 = vmatpush.xpose.msra.mxu0 0.0
      %1358 = vmatpush.xpose.msra.mxu0 0.0
      %1359 = vmatpush.xpose.msra.mxu0 0.0
      %1360 = vmatpush.xpose.msra.mxu0 0.0
      %1361 = vmatpush.xpose.msra.mxu0 %v1344
      %1362 = vmatmul.f32.gmra.mxu0 %v962
      %v1363 = vpop.f32.mrf.mxu0
      %v1364 = vadd.f32 0.0, %v1363
      %1365 = vdwg.mxu0
      %v1368 = vrot.slane %v942, 1
      %v1369 = vrot.slane %v943, 1
      %v1370 = vsel %vm1340, %v1368, %v1369
      %v1371 = vsel %vm957, %v1370, 0
      %1373 = vmatpush.xpose.msra.mxu0 0.0
      %1374 = vmatpush.xpose.msra.mxu0 0.0
      %1375 = vmatpush.xpose.msra.mxu0 0.0
      %1376 = vmatpush.xpose.msra.mxu0 0.0
      %1377 = vmatpush.xpose.msra.mxu0 0.0
      %1378 = vmatpush.xpose.msra.mxu0 0.0
      %1379 = vmatpush.xpose.msra.mxu0 0.0
      %1380 = vmatpush.xpose.msra.mxu0 0.0
      %1381 = vmatpush.xpose.msra.mxu0 0.0
      %1382 = vmatpush.xpose.msra.mxu0 0.0
      %1383 = vmatpush.xpose.msra.mxu0 0.0
      %1384 = vmatpush.xpose.msra.mxu0 0.0
      %1385 = vmatpush.xpose.msra.mxu0 0.0
      %1386 = vmatpush.xpose.msra.mxu0 0.0
      %1387 = vmatpush.xpose.msra.mxu0 0.0
      %1388 = vmatpush.xpose.msra.mxu0 %v1371
      %1389 = vmatmul.f32.gmra.mxu0 %v962
      %v1390 = vpop.f32.mrf.mxu0
      %v1391 = vadd.f32 0.0, %v1390
      %1392 = vdwg.mxu0
      %v1395 = vrot.slane %v944, 1
      %v1396 = vrot.slane %v945, 1
      %v1397 = vsel %vm1340, %v1395, %v1396
      %v1398 = vsel %vm957, %v1397, 0
      %1400 = vmatpush.xpose.msra.mxu0 0.0
      %1401 = vmatpush.xpose.msra.mxu0 0.0
      %1402 = vmatpush.xpose.msra.mxu0 0.0
      %1403 = vmatpush.xpose.msra.mxu0 0.0
      %1404 = vmatpush.xpose.msra.mxu0 0.0
      %1405 = vmatpush.xpose.msra.mxu0 0.0
      %1406 = vmatpush.xpose.msra.mxu0 0.0
      %1407 = vmatpush.xpose.msra.mxu0 0.0
      %1408 = vmatpush.xpose.msra.mxu0 0.0
      %1409 = vmatpush.xpose.msra.mxu0 0.0
      %1410 = vmatpush.xpose.msra.mxu0 0.0
      %1411 = vmatpush.xpose.msra.mxu0 0.0
      %1412 = vmatpush.xpose.msra.mxu0 0.0
      %1413 = vmatpush.xpose.msra.mxu0 0.0
      %1414 = vmatpush.xpose.msra.mxu0 0.0
      %1415 = vmatpush.xpose.msra.mxu0 %v1398
      %1416 = vmatmul.f32.gmra.mxu0 %v962
      %v1417 = vpop.f32.mrf.mxu0
      %v1418 = vadd.f32 0.0, %v1417
      %1419 = vdwg.mxu0
      %v1422 = vrot.slane %v946, 1
      %v1423 = vrot.slane %v947, 1
      %v1424 = vsel %vm1340, %v1422, %v1423
      %v1425 = vsel %vm957, %v1424, 0
      %1427 = vmatpush.xpose.msra.mxu0 0.0
      %1428 = vmatpush.xpose.msra.mxu0 0.0
      %1429 = vmatpush.xpose.msra.mxu0 0.0
      %1430 = vmatpush.xpose.msra.mxu0 0.0
      %1431 = vmatpush.xpose.msra.mxu0 0.0
      %1432 = vmatpush.xpose.msra.mxu0 0.0
      %1433 = vmatpush.xpose.msra.mxu0 0.0
      %1434 = vmatpush.xpose.msra.mxu0 0.0
      %1435 = vmatpush.xpose.msra.mxu0 0.0
      %1436 = vmatpush.xpose.msra.mxu0 0.0
      %1437 = vmatpush.xpose.msra.mxu0 0.0
      %1438 = vmatpush.xpose.msra.mxu0 0.0
      %1439 = vmatpush.xpose.msra.mxu0 0.0
      %1440 = vmatpush.xpose.msra.mxu0 0.0
      %1441 = vmatpush.xpose.msra.mxu0 0.0
      %1442 = vmatpush.xpose.msra.mxu0 %v1425
      %1443 = vmatmul.f32.gmra.mxu0 %v962
      %v1444 = vpop.f32.mrf.mxu0
      %v1445 = vadd.f32 0.0, %v1444
      %1446 = vdwg.mxu0
      %v1449 = vrot.slane %v948, 1
      %v1450 = vrot.slane %v949, 1
      %v1451 = vsel %vm1340, %v1449, %v1450
      %v1452 = vsel %vm957, %v1451, 0
      %1454 = vmatpush.xpose.msra.mxu0 0.0
      %1455 = vmatpush.xpose.msra.mxu0 0.0
      %1456 = vmatpush.xpose.msra.mxu0 0.0
      %1457 = vmatpush.xpose.msra.mxu0 0.0
      %1458 = vmatpush.xpose.msra.mxu0 0.0
      %1459 = vmatpush.xpose.msra.mxu0 0.0
      %1460 = vmatpush.xpose.msra.mxu0 0.0
      %1461 = vmatpush.xpose.msra.mxu0 0.0
      %1462 = vmatpush.xpose.msra.mxu0 0.0
      %1463 = vmatpush.xpose.msra.mxu0 0.0
      %1464 = vmatpush.xpose.msra.mxu0 0.0
      %1465 = vmatpush.xpose.msra.mxu0 0.0
      %1466 = vmatpush.xpose.msra.mxu0 0.0
      %1467 = vmatpush.xpose.msra.mxu0 0.0
      %1468 = vmatpush.xpose.msra.mxu0 0.0
      %1469 = vmatpush.xpose.msra.mxu0 %v1452
      %1470 = vmatmul.f32.gmra.mxu0 %v962
      %v1471 = vpop.f32.mrf.mxu0
      %v1472 = vadd.f32 0.0, %v1471
      %1473 = vdwg.mxu0
      %v1476 = vrot.slane %v950, 1
      %v1477 = vrot.slane %v951, 1
      %v1478 = vsel %vm1340, %v1476, %v1477
      %v1479 = vsel %vm957, %v1478, 0
      %1481 = vmatpush.xpose.msra.mxu0 0.0
      %1482 = vmatpush.xpose.msra.mxu0 0.0
      %1483 = vmatpush.xpose.msra.mxu0 0.0
      %1484 = vmatpush.xpose.msra.mxu0 0.0
      %1485 = vmatpush.xpose.msra.mxu0 0.0
      %1486 = vmatpush.xpose.msra.mxu0 0.0
      %1487 = vmatpush.xpose.msra.mxu0 0.0
      %1488 = vmatpush.xpose.msra.mxu0 0.0
      %1489 = vmatpush.xpose.msra.mxu0 0.0
      %1490 = vmatpush.xpose.msra.mxu0 0.0
      %1491 = vmatpush.xpose.msra.mxu0 0.0
      %1492 = vmatpush.xpose.msra.mxu0 0.0
      %1493 = vmatpush.xpose.msra.mxu0 0.0
      %1494 = vmatpush.xpose.msra.mxu0 0.0
      %1495 = vmatpush.xpose.msra.mxu0 0.0
      %1496 = vmatpush.xpose.msra.mxu0 %v1479
      %1497 = vmatmul.f32.gmra.mxu0 %v962
      %v1498 = vpop.f32.mrf.mxu0
      %v1499 = vadd.f32 0.0, %v1498
      %1500 = vdwg.mxu0
      %v1503 = vrot.slane %v952, 1
      %v1504 = vrot.slane %v953, 1
      %v1505 = vsel %vm1340, %v1503, %v1504
      %v1506 = vsel %vm957, %v1505, 0
      %1508 = vmatpush.xpose.msra.mxu0 0.0
      %1509 = vmatpush.xpose.msra.mxu0 0.0
      %1510 = vmatpush.xpose.msra.mxu0 0.0
      %1511 = vmatpush.xpose.msra.mxu0 0.0
      %1512 = vmatpush.xpose.msra.mxu0 0.0
      %1513 = vmatpush.xpose.msra.mxu0 0.0
      %1514 = vmatpush.xpose.msra.mxu0 0.0
      %1515 = vmatpush.xpose.msra.mxu0 0.0
      %1516 = vmatpush.xpose.msra.mxu0 0.0
      %1517 = vmatpush.xpose.msra.mxu0 0.0
      %1518 = vmatpush.xpose.msra.mxu0 0.0
      %1519 = vmatpush.xpose.msra.mxu0 0.0
      %1520 = vmatpush.xpose.msra.mxu0 0.0
      %1521 = vmatpush.xpose.msra.mxu0 0.0
      %1522 = vmatpush.xpose.msra.mxu0 0.0
      %1523 = vmatpush.xpose.msra.mxu0 %v1506
      %1524 = vmatmul.f32.gmra.mxu0 %v962
      %v1525 = vpop.f32.mrf.mxu0
      %v1526 = vadd.f32 0.0, %v1525
      %1527 = vdwg.mxu0
      %v1530 = vrot.slane %v954, 1
      %v1531 = vrot.slane %v955, 1
      %v1532 = vsel %vm1340, %v1530, %v1531
      %v1533 = vsel %vm957, %v1532, 0
      %1535 = vmatpush.xpose.msra.mxu0 0.0
      %1536 = vmatpush.xpose.msra.mxu0 0.0
      %1537 = vmatpush.xpose.msra.mxu0 0.0
      %1538 = vmatpush.xpose.msra.mxu0 0.0
      %1539 = vmatpush.xpose.msra.mxu0 0.0
      %1540 = vmatpush.xpose.msra.mxu0 0.0
      %1541 = vmatpush.xpose.msra.mxu0 0.0
      %1542 = vmatpush.xpose.msra.mxu0 0.0
      %1543 = vmatpush.xpose.msra.mxu0 0.0
      %1544 = vmatpush.xpose.msra.mxu0 0.0
      %1545 = vmatpush.xpose.msra.mxu0 0.0
      %1546 = vmatpush.xpose.msra.mxu0 0.0
      %1547 = vmatpush.xpose.msra.mxu0 0.0
      %1548 = vmatpush.xpose.msra.mxu0 0.0
      %1549 = vmatpush.xpose.msra.mxu0 0.0
      %1550 = vmatpush.xpose.msra.mxu0 %v1533
      %1551 = vmatmul.f32.gmra.mxu0 %v962
      %v1552 = vpop.f32.mrf.mxu0
      %v1553 = vadd.f32 0.0, %v1552
      %1554 = vdwg.mxu0
      %vm1555 = vcmask 62464
      %v1556 = vsel %vm1555, %v1364, -inf
      %1557 = vmax.xlane.f32.xlu0 %v1556
      %v1558 = vpop.xlane.xlu0 %1557
      %v1559 = vsel %vm1555, %v1391, -inf
      %1560 = vmax.xlane.f32.xlu0 %v1559
      %v1561 = vpop.xlane.xlu0 %1560
      %v1562 = vsel %vm1555, %v1418, -inf
      %1563 = vmax.xlane.f32.xlu0 %v1562
      %v1564 = vpop.xlane.xlu0 %1563
      %v1565 = vsel %vm1555, %v1445, -inf
      %1566 = vmax.xlane.f32.xlu0 %v1565
      %v1567 = vpop.xlane.xlu0 %1566
      %v1568 = vsel %vm1555, %v1472, -inf
      %1569 = vmax.xlane.f32.xlu0 %v1568
      %v1570 = vpop.xlane.xlu0 %1569
      %v1571 = vsel %vm1555, %v1499, -inf
      %1572 = vmax.xlane.f32.xlu0 %v1571
      %v1573 = vpop.xlane.xlu0 %1572
      %v1574 = vsel %vm1555, %v1526, -inf
      %1575 = vmax.xlane.f32.xlu0 %v1574
      %v1576 = vpop.xlane.xlu0 %1575
      %v1577 = vsel %vm1555, %v1553, -inf
      %1578 = vmax.xlane.f32.xlu0 %v1577
      %v1579 = vpop.xlane.xlu0 %1578
      %v1580 = vsub.f32 %v1364, %v1558
      %v1581 = vsub.f32 %v1391, %v1561
      %v1582 = vsub.f32 %v1418, %v1564
      %v1583 = vsub.f32 %v1445, %v1567
      %v1584 = vsub.f32 %v1472, %v1570
      %v1585 = vsub.f32 %v1499, %v1573
      %v1586 = vsub.f32 %v1526, %v1576
      %v1587 = vsub.f32 %v1553, %v1579
      %v1588 = vmul.f32 %v1580, 1.442695
      %v1589 = vpow.pop %v1588
      %v1590 = vmul.f32 %v1581, 1.442695
      %v1591 = vpow.pop %v1590
      %v1592 = vmul.f32 %v1582, 1.442695
      %v1593 = vpow.pop %v1592
      %v1594 = vmul.f32 %v1583, 1.442695
      %v1595 = vpow.pop %v1594
      %v1596 = vmul.f32 %v1584, 1.442695
      %v1597 = vpow.pop %v1596
      %v1598 = vmul.f32 %v1585, 1.442695
      %v1599 = vpow.pop %v1598
      %v1600 = vmul.f32 %v1586, 1.442695
      %v1601 = vpow.pop %v1600
      %v1602 = vmul.f32 %v1587, 1.442695
      %v1603 = vpow.pop %v1602
      %v1604 = vsel %vm1555, %v1589, 0.0
      %1605 = vadd.xlane.f32.xlu0 %v1604
      %v1606 = vpop.xlane.xlu0 %1605
      %v1607 = vsel %vm1555, %v1591, 0.0
      %1608 = vadd.xlane.f32.xlu0 %v1607
      %v1609 = vpop.xlane.xlu0 %1608
      %v1610 = vsel %vm1555, %v1593, 0.0
      %1611 = vadd.xlane.f32.xlu0 %v1610
      %v1612 = vpop.xlane.xlu0 %1611
      %v1613 = vsel %vm1555, %v1595, 0.0
      %1614 = vadd.xlane.f32.xlu0 %v1613
      %v1615 = vpop.xlane.xlu0 %1614
      %v1616 = vsel %vm1555, %v1597, 0.0
      %1617 = vadd.xlane.f32.xlu0 %v1616
      %v1618 = vpop.xlane.xlu0 %1617
      %v1619 = vsel %vm1555, %v1599, 0.0
      %1620 = vadd.xlane.f32.xlu0 %v1619
      %v1621 = vpop.xlane.xlu0 %1620
      %v1622 = vsel %vm1555, %v1601, 0.0
      %1623 = vadd.xlane.f32.xlu0 %v1622
      %v1624 = vpop.xlane.xlu0 %1623
      %v1625 = vsel %vm1555, %v1603, 0.0
      %1626 = vadd.xlane.f32.xlu0 %v1625
      %v1627 = vpop.xlane.xlu0 %1626
      %v1628 = vrcp.pop %v1606
      %v1629 = vmul.f32 %v1606, %v1628
      %v1630 = vsub.f32 1.0, %v1629
      %v1631 = vmul.f32 %v1628, %v1630
      %v1632 = vadd.f32 %v1628, %v1631
      %vm1633 = vweird.f32 %v1606
      %vm1634 = vweird.f32 %v1628
      %vm1635 = vmor %vm1633, %vm1634
      %v1636 = vsel %vm1635, %v1628, %v1632
      %v1637 = vand.u32 2147483647, %v1606
      %vm1638 = vcmp.eq.f32.partialorder %v1637, 8.507059e+37
      %v1639 = vand.u32 %v1606, 2147483648
      %v1640 = vor.u32 1.1754944e-38, %v1639
      %v1641 = vsel %vm1638, %v1640, %v1636
      %v1642 = vmul.f32 %v1589, %v1641
      %v1643 = vrcp.pop %v1609
      %v1644 = vmul.f32 %v1609, %v1643
      %v1645 = vsub.f32 1.0, %v1644
      %v1646 = vmul.f32 %v1643, %v1645
      %v1647 = vadd.f32 %v1643, %v1646
      %vm1648 = vweird.f32 %v1609
      %vm1649 = vweird.f32 %v1643
      %vm1650 = vmor %vm1648, %vm1649
      %v1651 = vsel %vm1650, %v1643, %v1647
      %v1652 = vand.u32 2147483647, %v1609
      %vm1653 = vcmp.eq.f32.partialorder %v1652, 8.507059e+37
      %v1654 = vand.u32 %v1609, 2147483648
      %v1655 = vor.u32 1.1754944e-38, %v1654
      %v1656 = vsel %vm1653, %v1655, %v1651
      %v1657 = vmul.f32 %v1591, %v1656
      %v1658 = vrcp.pop %v1612
      %v1659 = vmul.f32 %v1612, %v1658
      %v1660 = vsub.f32 1.0, %v1659
      %v1661 = vmul.f32 %v1658, %v1660
      %v1662 = vadd.f32 %v1658, %v1661
      %vm1663 = vweird.f32 %v1612
      %vm1664 = vweird.f32 %v1658
      %vm1665 = vmor %vm1663, %vm1664
      %v1666 = vsel %vm1665, %v1658, %v1662
      %v1667 = vand.u32 2147483647, %v1612
      %vm1668 = vcmp.eq.f32.partialorder %v1667, 8.507059e+37
      %v1669 = vand.u32 %v1612, 2147483648
      %v1670 = vor.u32 1.1754944e-38, %v1669
      %v1671 = vsel %vm1668, %v1670, %v1666
      %v1672 = vmul.f32 %v1593, %v1671
      %v1673 = vrcp.pop %v1615
      %v1674 = vmul.f32 %v1615, %v1673
      %v1675 = vsub.f32 1.0, %v1674
      %v1676 = vmul.f32 %v1673, %v1675
      %v1677 = vadd.f32 %v1673, %v1676
      %vm1678 = vweird.f32 %v1615
      %vm1679 = vweird.f32 %v1673
      %vm1680 = vmor %vm1678, %vm1679
      %v1681 = vsel %vm1680, %v1673, %v1677
      %v1682 = vand.u32 2147483647, %v1615
      %vm1683 = vcmp.eq.f32.partialorder %v1682, 8.507059e+37
      %v1684 = vand.u32 %v1615, 2147483648
      %v1685 = vor.u32 1.1754944e-38, %v1684
      %v1686 = vsel %vm1683, %v1685, %v1681
      %v1687 = vmul.f32 %v1595, %v1686
      %v1688 = vrcp.pop %v1618
      %v1689 = vmul.f32 %v1618, %v1688
      %v1690 = vsub.f32 1.0, %v1689
      %v1691 = vmul.f32 %v1688, %v1690
      %v1692 = vadd.f32 %v1688, %v1691
      %vm1693 = vweird.f32 %v1618
      %vm1694 = vweird.f32 %v1688
      %vm1695 = vmor %vm1693, %vm1694
      %v1696 = vsel %vm1695, %v1688, %v1692
      %v1697 = vand.u32 2147483647, %v1618
      %vm1698 = vcmp.eq.f32.partialorder %v1697, 8.507059e+37
      %v1699 = vand.u32 %v1618, 2147483648
      %v1700 = vor.u32 1.1754944e-38, %v1699
      %v1701 = vsel %vm1698, %v1700, %v1696
      %v1702 = vmul.f32 %v1597, %v1701
      %v1703 = vrcp.pop %v1621
      %v1704 = vmul.f32 %v1621, %v1703
      %v1705 = vsub.f32 1.0, %v1704
      %v1706 = vmul.f32 %v1703, %v1705
      %v1707 = vadd.f32 %v1703, %v1706
      %vm1708 = vweird.f32 %v1621
      %vm1709 = vweird.f32 %v1703
      %vm1710 = vmor %vm1708, %vm1709
      %v1711 = vsel %vm1710, %v1703, %v1707
      %v1712 = vand.u32 2147483647, %v1621
      %vm1713 = vcmp.eq.f32.partialorder %v1712, 8.507059e+37
      %v1714 = vand.u32 %v1621, 2147483648
      %v1715 = vor.u32 1.1754944e-38, %v1714
      %v1716 = vsel %vm1713, %v1715, %v1711
      %v1717 = vmul.f32 %v1599, %v1716
      %v1718 = vrcp.pop %v1624
      %v1719 = vmul.f32 %v1624, %v1718
      %v1720 = vsub.f32 1.0, %v1719
      %v1721 = vmul.f32 %v1718, %v1720
      %v1722 = vadd.f32 %v1718, %v1721
      %vm1723 = vweird.f32 %v1624
      %vm1724 = vweird.f32 %v1718
      %vm1725 = vmor %vm1723, %vm1724
      %v1726 = vsel %vm1725, %v1718, %v1722
      %v1727 = vand.u32 2147483647, %v1624
      %vm1728 = vcmp.eq.f32.partialorder %v1727, 8.507059e+37
      %v1729 = vand.u32 %v1624, 2147483648
      %v1730 = vor.u32 1.1754944e-38, %v1729
      %v1731 = vsel %vm1728, %v1730, %v1726
      %v1732 = vmul.f32 %v1601, %v1731
      %v1733 = vrcp.pop %v1627
      %v1734 = vmul.f32 %v1627, %v1733
      %v1735 = vsub.f32 1.0, %v1734
      %v1736 = vmul.f32 %v1733, %v1735
      %v1737 = vadd.f32 %v1733, %v1736
      %vm1738 = vweird.f32 %v1627
      %vm1739 = vweird.f32 %v1733
      %vm1740 = vmor %vm1738, %vm1739
      %v1741 = vsel %vm1740, %v1733, %v1737
      %v1742 = vand.u32 2147483647, %v1627
      %vm1743 = vcmp.eq.f32.partialorder %v1742, 8.507059e+37
      %v1744 = vand.u32 %v1627, 2147483648
      %v1745 = vor.u32 1.1754944e-38, %v1744
      %v1746 = vsel %vm1743, %v1745, %v1741
      %v1747 = vmul.f32 %v1603, %v1746
      %vm1749 = vcmask 64512
      %v1751 = vsel %vm1749, %v1642, 0
      %1753 = vmatpush.msra.mxu0 0.0
      %1754 = vmatpush.msra.mxu0 0.0
      %1755 = vmatpush.msra.mxu0 0.0
      %1756 = vmatpush.msra.mxu0 0.0
      %1757 = vmatpush.msra.mxu0 0.0
      %1758 = vmatpush.msra.mxu0 0.0
      %1759 = vmatpush.msra.mxu0 0.0
      %1760 = vmatpush.msra.mxu0 0.0
      %1761 = vmatpush.msra.mxu0 0.0
      %1762 = vmatpush.msra.mxu0 0.0
      %1763 = vmatpush.msra.mxu0 0.0
      %1764 = vmatpush.msra.mxu0 0.0
      %1765 = vmatpush.msra.mxu0 0.0
      %1766 = vmatpush.msra.mxu0 0.0
      %1767 = vmatpush.msra.mxu0 0.0
      %1768 = vmatpush.msra.mxu0 %v1343
      %1769 = vmatmul.f32.gmra.mxu0 %v1751
      %v1770 = vpop.f32.mrf.mxu0
      %v1771 = vadd.f32 0.0, %v1770
      %1772 = vdwg.mxu0
      %v1775 = vsel %vm1749, %v1657, 0
      %1777 = vmatpush.msra.mxu0 0.0
      %1778 = vmatpush.msra.mxu0 0.0
      %1779 = vmatpush.msra.mxu0 0.0
      %1780 = vmatpush.msra.mxu0 0.0
      %1781 = vmatpush.msra.mxu0 0.0
      %1782 = vmatpush.msra.mxu0 0.0
      %1783 = vmatpush.msra.mxu0 0.0
      %1784 = vmatpush.msra.mxu0 0.0
      %1785 = vmatpush.msra.mxu0 0.0
      %1786 = vmatpush.msra.mxu0 0.0
      %1787 = vmatpush.msra.mxu0 0.0
      %1788 = vmatpush.msra.mxu0 0.0
      %1789 = vmatpush.msra.mxu0 0.0
      %1790 = vmatpush.msra.mxu0 0.0
      %1791 = vmatpush.msra.mxu0 0.0
      %1792 = vmatpush.msra.mxu0 %v1370
      %1793 = vmatmul.f32.gmra.mxu0 %v1775
      %v1794 = vpop.f32.mrf.mxu0
      %v1795 = vadd.f32 0.0, %v1794
      %1796 = vdwg.mxu0
      %v1799 = vsel %vm1749, %v1672, 0
      %1801 = vmatpush.msra.mxu0 0.0
      %1802 = vmatpush.msra.mxu0 0.0
      %1803 = vmatpush.msra.mxu0 0.0
      %1804 = vmatpush.msra.mxu0 0.0
      %1805 = vmatpush.msra.mxu0 0.0
      %1806 = vmatpush.msra.mxu0 0.0
      %1807 = vmatpush.msra.mxu0 0.0
      %1808 = vmatpush.msra.mxu0 0.0
      %1809 = vmatpush.msra.mxu0 0.0
      %1810 = vmatpush.msra.mxu0 0.0
      %1811 = vmatpush.msra.mxu0 0.0
      %1812 = vmatpush.msra.mxu0 0.0
      %1813 = vmatpush.msra.mxu0 0.0
      %1814 = vmatpush.msra.mxu0 0.0
      %1815 = vmatpush.msra.mxu0 0.0
      %1816 = vmatpush.msra.mxu0 %v1397
      %1817 = vmatmul.f32.gmra.mxu0 %v1799
      %v1818 = vpop.f32.mrf.mxu0
      %v1819 = vadd.f32 0.0, %v1818
      %1820 = vdwg.mxu0
      %v1823 = vsel %vm1749, %v1687, 0
      %1825 = vmatpush.msra.mxu0 0.0
      %1826 = vmatpush.msra.mxu0 0.0
      %1827 = vmatpush.msra.mxu0 0.0
      %1828 = vmatpush.msra.mxu0 0.0
      %1829 = vmatpush.msra.mxu0 0.0
      %1830 = vmatpush.msra.mxu0 0.0
      %1831 = vmatpush.msra.mxu0 0.0
      %1832 = vmatpush.msra.mxu0 0.0
      %1833 = vmatpush.msra.mxu0 0.0
      %1834 = vmatpush.msra.mxu0 0.0
      %1835 = vmatpush.msra.mxu0 0.0
      %1836 = vmatpush.msra.mxu0 0.0
      %1837 = vmatpush.msra.mxu0 0.0
      %1838 = vmatpush.msra.mxu0 0.0
      %1839 = vmatpush.msra.mxu0 0.0
      %1840 = vmatpush.msra.mxu0 %v1424
      %1841 = vmatmul.f32.gmra.mxu0 %v1823
      %v1842 = vpop.f32.mrf.mxu0
      %v1843 = vadd.f32 0.0, %v1842
      %1844 = vdwg.mxu0
      %v1847 = vsel %vm1749, %v1702, 0
      %1849 = vmatpush.msra.mxu0 0.0
      %1850 = vmatpush.msra.mxu0 0.0
      %1851 = vmatpush.msra.mxu0 0.0
      %1852 = vmatpush.msra.mxu0 0.0
      %1853 = vmatpush.msra.mxu0 0.0
      %1854 = vmatpush.msra.mxu0 0.0
      %1855 = vmatpush.msra.mxu0 0.0
      %1856 = vmatpush.msra.mxu0 0.0
      %1857 = vmatpush.msra.mxu0 0.0
      %1858 = vmatpush.msra.mxu0 0.0
      %1859 = vmatpush.msra.mxu0 0.0
      %1860 = vmatpush.msra.mxu0 0.0
      %1861 = vmatpush.msra.mxu0 0.0
      %1862 = vmatpush.msra.mxu0 0.0
      %1863 = vmatpush.msra.mxu0 0.0
      %1864 = vmatpush.msra.mxu0 %v1451
      %1865 = vmatmul.f32.gmra.mxu0 %v1847
      %v1866 = vpop.f32.mrf.mxu0
      %v1867 = vadd.f32 0.0, %v1866
      %1868 = vdwg.mxu0
      %v1871 = vsel %vm1749, %v1717, 0
      %1873 = vmatpush.msra.mxu0 0.0
      %1874 = vmatpush.msra.mxu0 0.0
      %1875 = vmatpush.msra.mxu0 0.0
      %1876 = vmatpush.msra.mxu0 0.0
      %1877 = vmatpush.msra.mxu0 0.0
      %1878 = vmatpush.msra.mxu0 0.0
      %1879 = vmatpush.msra.mxu0 0.0
      %1880 = vmatpush.msra.mxu0 0.0
      %1881 = vmatpush.msra.mxu0 0.0
      %1882 = vmatpush.msra.mxu0 0.0
      %1883 = vmatpush.msra.mxu0 0.0
      %1884 = vmatpush.msra.mxu0 0.0
      %1885 = vmatpush.msra.mxu0 0.0
      %1886 = vmatpush.msra.mxu0 0.0
      %1887 = vmatpush.msra.mxu0 0.0
      %1888 = vmatpush.msra.mxu0 %v1478
      %1889 = vmatmul.f32.gmra.mxu0 %v1871
      %v1890 = vpop.f32.mrf.mxu0
      %v1891 = vadd.f32 0.0, %v1890
      %1892 = vdwg.mxu0
      %v1895 = vsel %vm1749, %v1732, 0
      %1897 = vmatpush.msra.mxu0 0.0
      %1898 = vmatpush.msra.mxu0 0.0
      %1899 = vmatpush.msra.mxu0 0.0
      %1900 = vmatpush.msra.mxu0 0.0
      %1901 = vmatpush.msra.mxu0 0.0
      %1902 = vmatpush.msra.mxu0 0.0
      %1903 = vmatpush.msra.mxu0 0.0
      %1904 = vmatpush.msra.mxu0 0.0
      %1905 = vmatpush.msra.mxu0 0.0
      %1906 = vmatpush.msra.mxu0 0.0
      %1907 = vmatpush.msra.mxu0 0.0
      %1908 = vmatpush.msra.mxu0 0.0
      %1909 = vmatpush.msra.mxu0 0.0
      %1910 = vmatpush.msra.mxu0 0.0
      %1911 = vmatpush.msra.mxu0 0.0
      %1912 = vmatpush.msra.mxu0 %v1505
      %1913 = vmatmul.f32.gmra.mxu0 %v1895
      %v1914 = vpop.f32.mrf.mxu0
      %v1915 = vadd.f32 0.0, %v1914
      %1916 = vdwg.mxu0
      %v1919 = vsel %vm1749, %v1747, 0
      %1921 = vmatpush.msra.mxu0 0.0
      %1922 = vmatpush.msra.mxu0 0.0
      %1923 = vmatpush.msra.mxu0 0.0
      %1924 = vmatpush.msra.mxu0 0.0
      %1925 = vmatpush.msra.mxu0 0.0
      %1926 = vmatpush.msra.mxu0 0.0
      %1927 = vmatpush.msra.mxu0 0.0
      %1928 = vmatpush.msra.mxu0 0.0
      %1929 = vmatpush.msra.mxu0 0.0
      %1930 = vmatpush.msra.mxu0 0.0
      %1931 = vmatpush.msra.mxu0 0.0
      %1932 = vmatpush.msra.mxu0 0.0
      %1933 = vmatpush.msra.mxu0 0.0
      %1934 = vmatpush.msra.mxu0 0.0
      %1935 = vmatpush.msra.mxu0 0.0
      %1936 = vmatpush.msra.mxu0 %v1532
      %1937 = vmatmul.f32.gmra.mxu0 %v1919
      %v1938 = vpop.f32.mrf.mxu0
      %v1939 = vadd.f32 0.0, %v1938
      %1940 = vdwg.mxu0
      %v1941 = vsel %vm1555, %v1642, -inf
      %1942 = vmax.xlane.f32.xlu0 %v1941
      %v1943 = vpop.xlane.xlu0 %1942
      %v1944 = vsel %vm1555, %v1657, -inf
      %1945 = vmax.xlane.f32.xlu0 %v1944
      %v1946 = vpop.xlane.xlu0 %1945
      %v1947 = vsel %vm1555, %v1672, -inf
      %1948 = vmax.xlane.f32.xlu0 %v1947
      %v1949 = vpop.xlane.xlu0 %1948
      %v1950 = vsel %vm1555, %v1687, -inf
      %1951 = vmax.xlane.f32.xlu0 %v1950
      %v1952 = vpop.xlane.xlu0 %1951
      %v1953 = vsel %vm1555, %v1702, -inf
      %1954 = vmax.xlane.f32.xlu0 %v1953
      %v1955 = vpop.xlane.xlu0 %1954
      %v1956 = vsel %vm1555, %v1717, -inf
      %1957 = vmax.xlane.f32.xlu0 %v1956
      %v1958 = vpop.xlane.xlu0 %1957
      %v1959 = vsel %vm1555, %v1732, -inf
      %1960 = vmax.xlane.f32.xlu0 %v1959
      %v1961 = vpop.xlane.xlu0 %1960
      %v1962 = vsel %vm1555, %v1747, -inf
      %1963 = vmax.xlane.f32.xlu0 %v1962
      %v1964 = vpop.xlane.xlu0 %1963
      %vm1965 = vcmask 48128
      %v1967 = vsel %vm1965, %v1232, 0
      %vm1969 = vcmask 1045504
      %v1971 = vsel %vm1969, %v1943, 0
      %1973 = vmatpush.msra.mxu0 0.0
      %1974 = vmatpush.msra.mxu0 0.0
      %1975 = vmatpush.msra.mxu0 0.0
      %1976 = vmatpush.msra.mxu0 0.0
      %1977 = vmatpush.msra.mxu0 0.0
      %1978 = vmatpush.msra.mxu0 0.0
      %1979 = vmatpush.msra.mxu0 0.0
      %1980 = vmatpush.msra.mxu0 0.0
      %1981 = vmatpush.msra.mxu0 0.0
      %1982 = vmatpush.msra.mxu0 0.0
      %1983 = vmatpush.msra.mxu0 0.0
      %1984 = vmatpush.msra.mxu0 0.0
      %1985 = vmatpush.msra.mxu0 0.0
      %1986 = vmatpush.msra.mxu0 0.0
      %1987 = vmatpush.msra.mxu0 0.0
      %1988 = vmatpush.msra.mxu0 %v1971
      %1989 = vmatmul.f32.gmra.mxu0 %v1967
      %v1990 = vpop.f32.mrf.mxu0
      %v1991 = vadd.f32 0.0, %v1990
      %1992 = vdwg.mxu0
      %v1994 = vsel %vm1965, %v1247, 0
      %v1997 = vsel %vm1969, %v1946, 0
      %1999 = vmatpush.msra.mxu0 0.0
      %2000 = vmatpush.msra.mxu0 0.0
      %2001 = vmatpush.msra.mxu0 0.0
      %2002 = vmatpush.msra.mxu0 0.0
      %2003 = vmatpush.msra.mxu0 0.0
      %2004 = vmatpush.msra.mxu0 0.0
      %2005 = vmatpush.msra.mxu0 0.0
      %2006 = vmatpush.msra.mxu0 0.0
      %2007 = vmatpush.msra.mxu0 0.0
      %2008 = vmatpush.msra.mxu0 0.0
      %2009 = vmatpush.msra.mxu0 0.0
      %2010 = vmatpush.msra.mxu0 0.0
      %2011 = vmatpush.msra.mxu0 0.0
      %2012 = vmatpush.msra.mxu0 0.0
      %2013 = vmatpush.msra.mxu0 0.0
      %2014 = vmatpush.msra.mxu0 %v1997
      %2015 = vmatmul.f32.gmra.mxu0 %v1994
      %v2016 = vpop.f32.mrf.mxu0
      %v2017 = vadd.f32 0.0, %v2016
      %2018 = vdwg.mxu0
      %v2020 = vsel %vm1965, %v1262, 0
      %v2023 = vsel %vm1969, %v1949, 0
      %2025 = vmatpush.msra.mxu0 0.0
      %2026 = vmatpush.msra.mxu0 0.0
      %2027 = vmatpush.msra.mxu0 0.0
      %2028 = vmatpush.msra.mxu0 0.0
      %2029 = vmatpush.msra.mxu0 0.0
      %2030 = vmatpush.msra.mxu0 0.0
      %2031 = vmatpush.msra.mxu0 0.0
      %2032 = vmatpush.msra.mxu0 0.0
      %2033 = vmatpush.msra.mxu0 0.0
      %2034 = vmatpush.msra.mxu0 0.0
      %2035 = vmatpush.msra.mxu0 0.0
      %2036 = vmatpush.msra.mxu0 0.0
      %2037 = vmatpush.msra.mxu0 0.0
      %2038 = vmatpush.msra.mxu0 0.0
      %2039 = vmatpush.msra.mxu0 0.0
      %2040 = vmatpush.msra.mxu0 %v2023
      %2041 = vmatmul.f32.gmra.mxu0 %v2020
      %v2042 = vpop.f32.mrf.mxu0
      %v2043 = vadd.f32 0.0, %v2042
      %2044 = vdwg.mxu0
      %v2046 = vsel %vm1965, %v1277, 0
      %v2049 = vsel %vm1969, %v1952, 0
      %2051 = vmatpush.msra.mxu0 0.0
      %2052 = vmatpush.msra.mxu0 0.0
      %2053 = vmatpush.msra.mxu0 0.0
      %2054 = vmatpush.msra.mxu0 0.0
      %2055 = vmatpush.msra.mxu0 0.0
      %2056 = vmatpush.msra.mxu0 0.0
      %2057 = vmatpush.msra.mxu0 0.0
      %2058 = vmatpush.msra.mxu0 0.0
      %2059 = vmatpush.msra.mxu0 0.0
      %2060 = vmatpush.msra.mxu0 0.0
      %2061 = vmatpush.msra.mxu0 0.0
      %2062 = vmatpush.msra.mxu0 0.0
      %2063 = vmatpush.msra.mxu0 0.0
      %2064 = vmatpush.msra.mxu0 0.0
      %2065 = vmatpush.msra.mxu0 0.0
      %2066 = vmatpush.msra.mxu0 %v2049
      %2067 = vmatmul.f32.gmra.mxu0 %v2046
      %v2068 = vpop.f32.mrf.mxu0
      %v2069 = vadd.f32 0.0, %v2068
      %2070 = vdwg.mxu0
      %v2072 = vsel %vm1965, %v1292, 0
      %v2075 = vsel %vm1969, %v1955, 0
      %2077 = vmatpush.msra.mxu0 0.0
      %2078 = vmatpush.msra.mxu0 0.0
      %2079 = vmatpush.msra.mxu0 0.0
      %2080 = vmatpush.msra.mxu0 0.0
      %2081 = vmatpush.msra.mxu0 0.0
      %2082 = vmatpush.msra.mxu0 0.0
      %2083 = vmatpush.msra.mxu0 0.0
      %2084 = vmatpush.msra.mxu0 0.0
      %2085 = vmatpush.msra.mxu0 0.0
      %2086 = vmatpush.msra.mxu0 0.0
      %2087 = vmatpush.msra.mxu0 0.0
      %2088 = vmatpush.msra.mxu0 0.0
      %2089 = vmatpush.msra.mxu0 0.0
      %2090 = vmatpush.msra.mxu0 0.0
      %2091 = vmatpush.msra.mxu0 0.0
      %2092 = vmatpush.msra.mxu0 %v2075
      %2093 = vmatmul.f32.gmra.mxu0 %v2072
      %v2094 = vpop.f32.mrf.mxu0
      %v2095 = vadd.f32 0.0, %v2094
      %2096 = vdwg.mxu0
      %v2098 = vsel %vm1965, %v1307, 0
      %v2101 = vsel %vm1969, %v1958, 0
      %2103 = vmatpush.msra.mxu0 0.0
      %2104 = vmatpush.msra.mxu0 0.0
      %2105 = vmatpush.msra.mxu0 0.0
      %2106 = vmatpush.msra.mxu0 0.0
      %2107 = vmatpush.msra.mxu0 0.0
      %2108 = vmatpush.msra.mxu0 0.0
      %2109 = vmatpush.msra.mxu0 0.0
      %2110 = vmatpush.msra.mxu0 0.0
      %2111 = vmatpush.msra.mxu0 0.0
      %2112 = vmatpush.msra.mxu0 0.0
      %2113 = vmatpush.msra.mxu0 0.0
      %2114 = vmatpush.msra.mxu0 0.0
      %2115 = vmatpush.msra.mxu0 0.0
      %2116 = vmatpush.msra.mxu0 0.0
      %2117 = vmatpush.msra.mxu0 0.0
      %2118 = vmatpush.msra.mxu0 %v2101
      %2119 = vmatmul.f32.gmra.mxu0 %v2098
      %v2120 = vpop.f32.mrf.mxu0
      %v2121 = vadd.f32 0.0, %v2120
      %2122 = vdwg.mxu0
      %v2124 = vsel %vm1965, %v1322, 0
      %v2127 = vsel %vm1969, %v1961, 0
      %2129 = vmatpush.msra.mxu0 0.0
      %2130 = vmatpush.msra.mxu0 0.0
      %2131 = vmatpush.msra.mxu0 0.0
      %2132 = vmatpush.msra.mxu0 0.0
      %2133 = vmatpush.msra.mxu0 0.0
      %2134 = vmatpush.msra.mxu0 0.0
      %2135 = vmatpush.msra.mxu0 0.0
      %2136 = vmatpush.msra.mxu0 0.0
      %2137 = vmatpush.msra.mxu0 0.0
      %2138 = vmatpush.msra.mxu0 0.0
      %2139 = vmatpush.msra.mxu0 0.0
      %2140 = vmatpush.msra.mxu0 0.0
      %2141 = vmatpush.msra.mxu0 0.0
      %2142 = vmatpush.msra.mxu0 0.0
      %2143 = vmatpush.msra.mxu0 0.0
      %2144 = vmatpush.msra.mxu0 %v2127
      %2145 = vmatmul.f32.gmra.mxu0 %v2124
      %v2146 = vpop.f32.mrf.mxu0
      %v2147 = vadd.f32 0.0, %v2146
      %2148 = vdwg.mxu0
      %v2150 = vsel %vm1965, %v1337, 0
      %v2153 = vsel %vm1969, %v1964, 0
      %2155 = vmatpush.msra.mxu0 0.0
      %2156 = vmatpush.msra.mxu0 0.0
      %2157 = vmatpush.msra.mxu0 0.0
      %2158 = vmatpush.msra.mxu0 0.0
      %2159 = vmatpush.msra.mxu0 0.0
      %2160 = vmatpush.msra.mxu0 0.0
      %2161 = vmatpush.msra.mxu0 0.0
      %2162 = vmatpush.msra.mxu0 0.0
      %2163 = vmatpush.msra.mxu0 0.0
      %2164 = vmatpush.msra.mxu0 0.0
      %2165 = vmatpush.msra.mxu0 0.0
      %2166 = vmatpush.msra.mxu0 0.0
      %2167 = vmatpush.msra.mxu0 0.0
      %2168 = vmatpush.msra.mxu0 0.0
      %2169 = vmatpush.msra.mxu0 0.0
      %2170 = vmatpush.msra.mxu0 %v2153
      %2171 = vmatmul.f32.gmra.mxu0 %v2150
      %v2172 = vpop.f32.mrf.mxu0
      %v2173 = vadd.f32 0.0, %v2172
      %2174 = vdwg.mxu0
      %v2176 = vsel %vm1969, %v1771, 0
      %2178 = vmatpush.msra.mxu0 0.0
      %2179 = vmatpush.msra.mxu0 0.0
      %2180 = vmatpush.msra.mxu0 0.0
      %2181 = vmatpush.msra.mxu0 0.0
      %2182 = vmatpush.msra.mxu0 0.0
      %2183 = vmatpush.msra.mxu0 0.0
      %2184 = vmatpush.msra.mxu0 0.0
      %2185 = vmatpush.msra.mxu0 0.0
      %2186 = vmatpush.msra.mxu0 0.0
      %2187 = vmatpush.msra.mxu0 0.0
      %2188 = vmatpush.msra.mxu0 0.0
      %2189 = vmatpush.msra.mxu0 0.0
      %2190 = vmatpush.msra.mxu0 0.0
      %2191 = vmatpush.msra.mxu0 0.0
      %2192 = vmatpush.msra.mxu0 0.0
      %2193 = vmatpush.msra.mxu0 %v2176
      %2194 = vmatmul.f32.gmra.mxu0 %v1967
      %v2195 = vpop.f32.mrf.mxu0
      %v2196 = vadd.f32 0.0, %v2195
      %2197 = vdwg.mxu0
      %v2199 = vsel %vm1969, %v1795, 0
      %2201 = vmatpush.msra.mxu0 0.0
      %2202 = vmatpush.msra.mxu0 0.0
      %2203 = vmatpush.msra.mxu0 0.0
      %2204 = vmatpush.msra.mxu0 0.0
      %2205 = vmatpush.msra.mxu0 0.0
      %2206 = vmatpush.msra.mxu0 0.0
      %2207 = vmatpush.msra.mxu0 0.0
      %2208 = vmatpush.msra.mxu0 0.0
      %2209 = vmatpush.msra.mxu0 0.0
      %2210 = vmatpush.msra.mxu0 0.0
      %2211 = vmatpush.msra.mxu0 0.0
      %2212 = vmatpush.msra.mxu0 0.0
      %2213 = vmatpush.msra.mxu0 0.0
      %2214 = vmatpush.msra.mxu0 0.0
      %2215 = vmatpush.msra.mxu0 0.0
      %2216 = vmatpush.msra.mxu0 %v2199
      %2217 = vmatmul.f32.gmra.mxu0 %v1994
      %v2218 = vpop.f32.mrf.mxu0
      %v2219 = vadd.f32 0.0, %v2218
      %2220 = vdwg.mxu0
      %v2222 = vsel %vm1969, %v1819, 0
      %2224 = vmatpush.msra.mxu0 0.0
      %2225 = vmatpush.msra.mxu0 0.0
      %2226 = vmatpush.msra.mxu0 0.0
      %2227 = vmatpush.msra.mxu0 0.0
      %2228 = vmatpush.msra.mxu0 0.0
      %2229 = vmatpush.msra.mxu0 0.0
      %2230 = vmatpush.msra.mxu0 0.0
      %2231 = vmatpush.msra.mxu0 0.0
      %2232 = vmatpush.msra.mxu0 0.0
      %2233 = vmatpush.msra.mxu0 0.0
      %2234 = vmatpush.msra.mxu0 0.0
      %2235 = vmatpush.msra.mxu0 0.0
      %2236 = vmatpush.msra.mxu0 0.0
      %2237 = vmatpush.msra.mxu0 0.0
      %2238 = vmatpush.msra.mxu0 0.0
      %2239 = vmatpush.msra.mxu0 %v2222
      %2240 = vmatmul.f32.gmra.mxu0 %v2020
      %v2241 = vpop.f32.mrf.mxu0
      %v2242 = vadd.f32 0.0, %v2241
      %2243 = vdwg.mxu0
      %v2245 = vsel %vm1969, %v1843, 0
      %2247 = vmatpush.msra.mxu0 0.0
      %2248 = vmatpush.msra.mxu0 0.0
      %2249 = vmatpush.msra.mxu0 0.0
      %2250 = vmatpush.msra.mxu0 0.0
      %2251 = vmatpush.msra.mxu0 0.0
      %2252 = vmatpush.msra.mxu0 0.0
      %2253 = vmatpush.msra.mxu0 0.0
      %2254 = vmatpush.msra.mxu0 0.0
      %2255 = vmatpush.msra.mxu0 0.0
      %2256 = vmatpush.msra.mxu0 0.0
      %2257 = vmatpush.msra.mxu0 0.0
      %2258 = vmatpush.msra.mxu0 0.0
      %2259 = vmatpush.msra.mxu0 0.0
      %2260 = vmatpush.msra.mxu0 0.0
      %2261 = vmatpush.msra.mxu0 0.0
      %2262 = vmatpush.msra.mxu0 %v2245
      %2263 = vmatmul.f32.gmra.mxu0 %v2046
      %v2264 = vpop.f32.mrf.mxu0
      %v2265 = vadd.f32 0.0, %v2264
      %2266 = vdwg.mxu0
      %v2268 = vsel %vm1969, %v1867, 0
      %2270 = vmatpush.msra.mxu0 0.0
      %2271 = vmatpush.msra.mxu0 0.0
      %2272 = vmatpush.msra.mxu0 0.0
      %2273 = vmatpush.msra.mxu0 0.0
      %2274 = vmatpush.msra.mxu0 0.0
      %2275 = vmatpush.msra.mxu0 0.0
      %2276 = vmatpush.msra.mxu0 0.0
      %2277 = vmatpush.msra.mxu0 0.0
      %2278 = vmatpush.msra.mxu0 0.0
      %2279 = vmatpush.msra.mxu0 0.0
      %2280 = vmatpush.msra.mxu0 0.0
      %2281 = vmatpush.msra.mxu0 0.0
      %2282 = vmatpush.msra.mxu0 0.0
      %2283 = vmatpush.msra.mxu0 0.0
      %2284 = vmatpush.msra.mxu0 0.0
      %2285 = vmatpush.msra.mxu0 %v2268
      %2286 = vmatmul.f32.gmra.mxu0 %v2072
      %v2287 = vpop.f32.mrf.mxu0
      %v2288 = vadd.f32 0.0, %v2287
      %2289 = vdwg.mxu0
      %v2291 = vsel %vm1969, %v1891, 0
      %2293 = vmatpush.msra.mxu0 0.0
      %2294 = vmatpush.msra.mxu0 0.0
      %2295 = vmatpush.msra.mxu0 0.0
      %2296 = vmatpush.msra.mxu0 0.0
      %2297 = vmatpush.msra.mxu0 0.0
      %2298 = vmatpush.msra.mxu0 0.0
      %2299 = vmatpush.msra.mxu0 0.0
      %2300 = vmatpush.msra.mxu0 0.0
      %2301 = vmatpush.msra.mxu0 0.0
      %2302 = vmatpush.msra.mxu0 0.0
      %2303 = vmatpush.msra.mxu0 0.0
      %2304 = vmatpush.msra.mxu0 0.0
      %2305 = vmatpush.msra.mxu0 0.0
      %2306 = vmatpush.msra.mxu0 0.0
      %2307 = vmatpush.msra.mxu0 0.0
      %2308 = vmatpush.msra.mxu0 %v2291
      %2309 = vmatmul.f32.gmra.mxu0 %v2098
      %v2310 = vpop.f32.mrf.mxu0
      %v2311 = vadd.f32 0.0, %v2310
      %2312 = vdwg.mxu0
      %v2314 = vsel %vm1969, %v1915, 0
      %2316 = vmatpush.msra.mxu0 0.0
      %2317 = vmatpush.msra.mxu0 0.0
      %2318 = vmatpush.msra.mxu0 0.0
      %2319 = vmatpush.msra.mxu0 0.0
      %2320 = vmatpush.msra.mxu0 0.0
      %2321 = vmatpush.msra.mxu0 0.0
      %2322 = vmatpush.msra.mxu0 0.0
      %2323 = vmatpush.msra.mxu0 0.0
      %2324 = vmatpush.msra.mxu0 0.0
      %2325 = vmatpush.msra.mxu0 0.0
      %2326 = vmatpush.msra.mxu0 0.0
      %2327 = vmatpush.msra.mxu0 0.0
      %2328 = vmatpush.msra.mxu0 0.0
      %2329 = vmatpush.msra.mxu0 0.0
      %2330 = vmatpush.msra.mxu0 0.0
      %2331 = vmatpush.msra.mxu0 %v2314
      %2332 = vmatmul.f32.gmra.mxu0 %v2124
      %v2333 = vpop.f32.mrf.mxu0
      %v2334 = vadd.f32 0.0, %v2333
      %2335 = vdwg.mxu0
      %v2337 = vsel %vm1969, %v1939, 0
      %2339 = vmatpush.msra.mxu0 0.0
      %2340 = vmatpush.msra.mxu0 0.0
      %2341 = vmatpush.msra.mxu0 0.0
      %2342 = vmatpush.msra.mxu0 0.0
      %2343 = vmatpush.msra.mxu0 0.0
      %2344 = vmatpush.msra.mxu0 0.0
      %2345 = vmatpush.msra.mxu0 0.0
      %2346 = vmatpush.msra.mxu0 0.0
      %2347 = vmatpush.msra.mxu0 0.0
      %2348 = vmatpush.msra.mxu0 0.0
      %2349 = vmatpush.msra.mxu0 0.0
      %2350 = vmatpush.msra.mxu0 0.0
      %2351 = vmatpush.msra.mxu0 0.0
      %2352 = vmatpush.msra.mxu0 0.0
      %2353 = vmatpush.msra.mxu0 0.0
      %2354 = vmatpush.msra.mxu0 %v2337
      %2355 = vmatmul.f32.gmra.mxu0 %v2150
      %v2356 = vpop.f32.mrf.mxu0
      %v2357 = vadd.f32 0.0, %v2356
      %2358 = vdwg.mxu0
      %v2359 = vsub.f32 1.0, %v1991
      %v2360 = vsub.f32 1.0, %v2017
      %v2361 = vsub.f32 1.0, %v2043
      %v2362 = vsub.f32 1.0, %v2069
      %v2363 = vsub.f32 1.0, %v2095
      %v2364 = vsub.f32 1.0, %v2121
      %v2365 = vsub.f32 1.0, %v2147
      %v2366 = vsub.f32 1.0, %v2173
      %2368 = vset.pattern.permute.xlu0 0
      %2369 = vperm.xlu0 %2368, %v2359
      %v2370 = vpop.permute.xlu0 %2369
      %2373 = vset.pattern.permute.xlu0 0
      %2374 = vperm.xlu0 %2373, %v2360
      %v2375 = vpop.permute.xlu0 %2374
      %2378 = vset.pattern.permute.xlu0 0
      %2379 = vperm.xlu0 %2378, %v2361
      %v2380 = vpop.permute.xlu0 %2379
      %2383 = vset.pattern.permute.xlu0 0
      %2384 = vperm.xlu0 %2383, %v2362
      %v2385 = vpop.permute.xlu0 %2384
      %2388 = vset.pattern.permute.xlu0 0
      %2389 = vperm.xlu0 %2388, %v2363
      %v2390 = vpop.permute.xlu0 %2389
      %2393 = vset.pattern.permute.xlu0 0
      %2394 = vperm.xlu0 %2393, %v2364
      %v2395 = vpop.permute.xlu0 %2394
      %2398 = vset.pattern.permute.xlu0 0
      %2399 = vperm.xlu0 %2398, %v2365
      %v2400 = vpop.permute.xlu0 %2399
      %2403 = vset.pattern.permute.xlu0 0
      %2404 = vperm.xlu0 %2403, %v2366
      %v2405 = vpop.permute.xlu0 %2404
      %v2407 = vmul.f32 %v2370, %v728
      %v2408 = vmul.f32 %v2375, %v757
      %v2409 = vmul.f32 %v2380, %v786
      %v2410 = vmul.f32 %v2385, %v815
      %v2411 = vmul.f32 %v2390, %v844
      %v2412 = vmul.f32 %v2395, %v873
      %v2413 = vmul.f32 %v2400, %v902
      %v2414 = vmul.f32 %v2405, %v931
      %2416 = vset.pattern.permute.xlu0 0
      %2417 = vperm.xlu0 %2416, %v1991
      %v2418 = vpop.permute.xlu0 %2417
      %2421 = vset.pattern.permute.xlu0 0
      %2422 = vperm.xlu0 %2421, %v2017
      %v2423 = vpop.permute.xlu0 %2422
      %2426 = vset.pattern.permute.xlu0 0
      %2427 = vperm.xlu0 %2426, %v2043
      %v2428 = vpop.permute.xlu0 %2427
      %2431 = vset.pattern.permute.xlu0 0
      %2432 = vperm.xlu0 %2431, %v2069
      %v2433 = vpop.permute.xlu0 %2432
      %2436 = vset.pattern.permute.xlu0 0
      %2437 = vperm.xlu0 %2436, %v2095
      %v2438 = vpop.permute.xlu0 %2437
      %2441 = vset.pattern.permute.xlu0 0
      %2442 = vperm.xlu0 %2441, %v2121
      %v2443 = vpop.permute.xlu0 %2442
      %2446 = vset.pattern.permute.xlu0 0
      %2447 = vperm.xlu0 %2446, %v2147
      %v2448 = vpop.permute.xlu0 %2447
      %2451 = vset.pattern.permute.xlu0 0
      %2452 = vperm.xlu0 %2451, %v2173
      %v2453 = vpop.permute.xlu0 %2452
      %v2455 = vmul.f32 %v2418, %v2196
      %v2456 = vmul.f32 %v2423, %v2219
      %v2457 = vmul.f32 %v2428, %v2242
      %v2458 = vmul.f32 %v2433, %v2265
      %v2459 = vmul.f32 %v2438, %v2288
      %v2460 = vmul.f32 %v2443, %v2311
      %v2461 = vmul.f32 %v2448, %v2334
      %v2462 = vmul.f32 %v2453, %v2357
      %v2463 = vadd.f32 %v2407, %v2455
      %v2464 = vadd.f32 %v2408, %v2456
      %v2465 = vadd.f32 %v2409, %v2457
      %v2466 = vadd.f32 %v2410, %v2458
      %v2467 = vadd.f32 %v2411, %v2459
      %v2468 = vadd.f32 %v2412, %v2460
      %v2469 = vadd.f32 %v2413, %v2461
      %v2470 = vadd.f32 %v2414, %v2462
      %v2471 = vmul.f32 %v2463, %v2463
      %v2472 = vmul.f32 %v2464, %v2464
      %v2473 = vmul.f32 %v2465, %v2465
      %v2474 = vmul.f32 %v2466, %v2466
      %v2475 = vmul.f32 %v2467, %v2467
      %v2476 = vmul.f32 %v2468, %v2468
      %v2477 = vmul.f32 %v2469, %v2469
      %v2478 = vmul.f32 %v2470, %v2470
      %vm2479 = vcmask 122880
      %v2480 = vsel %vm2479, %v2471, 0.0
      %2481 = vadd.xlane.f32.xlu0 %v2480
      %v2482 = vpop.xlane.xlu0 %2481
      %v2483 = vsel %vm2479, %v2472, 0.0
      %2484 = vadd.xlane.f32.xlu0 %v2483
      %v2485 = vpop.xlane.xlu0 %2484
      %v2486 = vsel %vm2479, %v2473, 0.0
      %2487 = vadd.xlane.f32.xlu0 %v2486
      %v2488 = vpop.xlane.xlu0 %2487
      %v2489 = vsel %vm2479, %v2474, 0.0
      %2490 = vadd.xlane.f32.xlu0 %v2489
      %v2491 = vpop.xlane.xlu0 %2490
      %v2492 = vsel %vm2479, %v2475, 0.0
      %2493 = vadd.xlane.f32.xlu0 %v2492
      %v2494 = vpop.xlane.xlu0 %2493
      %v2495 = vsel %vm2479, %v2476, 0.0
      %2496 = vadd.xlane.f32.xlu0 %v2495
      %v2497 = vpop.xlane.xlu0 %2496
      %v2498 = vsel %vm2479, %v2477, 0.0
      %2499 = vadd.xlane.f32.xlu0 %v2498
      %v2500 = vpop.xlane.xlu0 %2499
      %v2501 = vsel %vm2479, %v2478, 0.0
      %2502 = vadd.xlane.f32.xlu0 %v2501
      %v2503 = vpop.xlane.xlu0 %2502
      %v2504 = vrsqrt.pop %v2482
      %v2505 = vmul.f32 %v2504, %v2482
      %v2506 = vmul.f32 %v2505, %v2504
      %v2507 = vmul.f32 0.5, %v2506
      %v2508 = vsub.f32 1.5, %v2507
      %v2509 = vmul.f32 %v2504, %v2508
      %vm2510 = vweird.f32 %v2482
      %vm2511 = vweird.f32 %v2504
      %vm2512 = vmor %vm2510, %vm2511
      %v2513 = vsel %vm2512, %v2504, %v2509
      %v2514 = vrsqrt.pop %v2485
      %v2515 = vmul.f32 %v2514, %v2485
      %v2516 = vmul.f32 %v2515, %v2514
      %v2517 = vmul.f32 0.5, %v2516
      %v2518 = vsub.f32 1.5, %v2517
      %v2519 = vmul.f32 %v2514, %v2518
      %vm2520 = vweird.f32 %v2485
      %vm2521 = vweird.f32 %v2514
      %vm2522 = vmor %vm2520, %vm2521
      %v2523 = vsel %vm2522, %v2514, %v2519
      %v2524 = vrsqrt.pop %v2488
      %v2525 = vmul.f32 %v2524, %v2488
      %v2526 = vmul.f32 %v2525, %v2524
      %v2527 = vmul.f32 0.5, %v2526
      %v2528 = vsub.f32 1.5, %v2527
      %v2529 = vmul.f32 %v2524, %v2528
      %vm2530 = vweird.f32 %v2488
      %vm2531 = vweird.f32 %v2524
      %vm2532 = vmor %vm2530, %vm2531
      %v2533 = vsel %vm2532, %v2524, %v2529
      %v2534 = vrsqrt.pop %v2491
      %v2535 = vmul.f32 %v2534, %v2491
      %v2536 = vmul.f32 %v2535, %v2534
      %v2537 = vmul.f32 0.5, %v2536
      %v2538 = vsub.f32 1.5, %v2537
      %v2539 = vmul.f32 %v2534, %v2538
      %vm2540 = vweird.f32 %v2491
      %vm2541 = vweird.f32 %v2534
      %vm2542 = vmor %vm2540, %vm2541
      %v2543 = vsel %vm2542, %v2534, %v2539
      %v2544 = vrsqrt.pop %v2494
      %v2545 = vmul.f32 %v2544, %v2494
      %v2546 = vmul.f32 %v2545, %v2544
      %v2547 = vmul.f32 0.5, %v2546
      %v2548 = vsub.f32 1.5, %v2547
      %v2549 = vmul.f32 %v2544, %v2548
      %vm2550 = vweird.f32 %v2494
      %vm2551 = vweird.f32 %v2544
      %vm2552 = vmor %vm2550, %vm2551
      %v2553 = vsel %vm2552, %v2544, %v2549
      %v2554 = vrsqrt.pop %v2497
      %v2555 = vmul.f32 %v2554, %v2497
      %v2556 = vmul.f32 %v2555, %v2554
      %v2557 = vmul.f32 0.5, %v2556
      %v2558 = vsub.f32 1.5, %v2557
      %v2559 = vmul.f32 %v2554, %v2558
      %vm2560 = vweird.f32 %v2497
      %vm2561 = vweird.f32 %v2554
      %vm2562 = vmor %vm2560, %vm2561
      %v2563 = vsel %vm2562, %v2554, %v2559
      %v2564 = vrsqrt.pop %v2500
      %v2565 = vmul.f32 %v2564, %v2500
      %v2566 = vmul.f32 %v2565, %v2564
      %v2567 = vmul.f32 0.5, %v2566
      %v2568 = vsub.f32 1.5, %v2567
      %v2569 = vmul.f32 %v2564, %v2568
      %vm2570 = vweird.f32 %v2500
      %vm2571 = vweird.f32 %v2564
      %vm2572 = vmor %vm2570, %vm2571
      %v2573 = vsel %vm2572, %v2564, %v2569
      %v2574 = vrsqrt.pop %v2503
      %v2575 = vmul.f32 %v2574, %v2503
      %v2576 = vmul.f32 %v2575, %v2574
      %v2577 = vmul.f32 0.5, %v2576
      %v2578 = vsub.f32 1.5, %v2577
      %v2579 = vmul.f32 %v2574, %v2578
      %vm2580 = vweird.f32 %v2503
      %vm2581 = vweird.f32 %v2574
      %vm2582 = vmor %vm2580, %vm2581
      %v2583 = vsel %vm2582, %v2574, %v2579
      %v2584 = vmul.f32 %v2463, %v2513
      %v2585 = vmul.f32 %v2464, %v2523
      %v2586 = vmul.f32 %v2465, %v2533
      %v2587 = vmul.f32 %v2466, %v2543
      %v2588 = vmul.f32 %v2467, %v2553
      %v2589 = vmul.f32 %v2468, %v2563
      %v2590 = vmul.f32 %v2469, %v2573
      %v2591 = vmul.f32 %v2470, %v2583
      %v2592 = vld [vmem:[%s6] sm:$0xff]
      %v2593 = vld [vmem:[%s6 + $0x8] sm:$0xff]
      %v2595 = vsel %vm957, %v2584, 0
      %2597 = vmatpush.msra.mxu0 0.0
      %2598 = vmatpush.msra.mxu0 0.0
      %2599 = vmatpush.msra.mxu0 0.0
      %2600 = vmatpush.msra.mxu0 0.0
      %2601 = vmatpush.msra.mxu0 0.0
      %2602 = vmatpush.msra.mxu0 0.0
      %2603 = vmatpush.msra.mxu0 0.0
      %2604 = vmatpush.msra.mxu0 0.0
      %2605 = vmatpush.msra.mxu0 0.0
      %2606 = vmatpush.msra.mxu0 0.0
      %2607 = vmatpush.msra.mxu0 0.0
      %2608 = vmatpush.msra.mxu0 0.0
      %2609 = vmatpush.msra.mxu0 0.0
      %2610 = vmatpush.msra.mxu0 0.0
      %2611 = vmatpush.msra.mxu0 %v2593
      %2612 = vmatpush.msra.mxu0 %v2592
      %2613 = vmatmul.f32.gmra.mxu0 %v2595
      %v2614 = vpop.f32.mrf.mxu0
      %v2615 = vadd.f32 0.0, %v2614
      %2616 = vdwg.mxu0
      %v2618 = vsel %vm957, %v2585, 0
      %2620 = vmatpush.msra.mxu0 0.0
      %2621 = vmatpush.msra.mxu0 0.0
      %2622 = vmatpush.msra.mxu0 0.0
      %2623 = vmatpush.msra.mxu0 0.0
      %2624 = vmatpush.msra.mxu0 0.0
      %2625 = vmatpush.msra.mxu0 0.0
      %2626 = vmatpush.msra.mxu0 0.0
      %2627 = vmatpush.msra.mxu0 0.0
      %2628 = vmatpush.msra.mxu0 0.0
      %2629 = vmatpush.msra.mxu0 0.0
      %2630 = vmatpush.msra.mxu0 0.0
      %2631 = vmatpush.msra.mxu0 0.0
      %2632 = vmatpush.msra.mxu0 0.0
      %2633 = vmatpush.msra.mxu0 0.0
      %2634 = vmatpush.msra.mxu0 %v2593
      %2635 = vmatpush.msra.mxu0 %v2592
      %2636 = vmatmul.f32.gmra.mxu0 %v2618
      %v2637 = vpop.f32.mrf.mxu0
      %v2638 = vadd.f32 0.0, %v2637
      %2639 = vdwg.mxu0
      %v2641 = vsel %vm957, %v2586, 0
      %2643 = vmatpush.msra.mxu0 0.0
      %2644 = vmatpush.msra.mxu0 0.0
      %2645 = vmatpush.msra.mxu0 0.0
      %2646 = vmatpush.msra.mxu0 0.0
      %2647 = vmatpush.msra.mxu0 0.0
      %2648 = vmatpush.msra.mxu0 0.0
      %2649 = vmatpush.msra.mxu0 0.0
      %2650 = vmatpush.msra.mxu0 0.0
      %2651 = vmatpush.msra.mxu0 0.0
      %2652 = vmatpush.msra.mxu0 0.0
      %2653 = vmatpush.msra.mxu0 0.0
      %2654 = vmatpush.msra.mxu0 0.0
      %2655 = vmatpush.msra.mxu0 0.0
      %2656 = vmatpush.msra.mxu0 0.0
      %2657 = vmatpush.msra.mxu0 %v2593
      %2658 = vmatpush.msra.mxu0 %v2592
      %2659 = vmatmul.f32.gmra.mxu0 %v2641
      %v2660 = vpop.f32.mrf.mxu0
      %v2661 = vadd.f32 0.0, %v2660
      %2662 = vdwg.mxu0
      %v2664 = vsel %vm957, %v2587, 0
      %2666 = vmatpush.msra.mxu0 0.0
      %2667 = vmatpush.msra.mxu0 0.0
      %2668 = vmatpush.msra.mxu0 0.0
      %2669 = vmatpush.msra.mxu0 0.0
      %2670 = vmatpush.msra.mxu0 0.0
      %2671 = vmatpush.msra.mxu0 0.0
      %2672 = vmatpush.msra.mxu0 0.0
      %2673 = vmatpush.msra.mxu0 0.0
      %2674 = vmatpush.msra.mxu0 0.0
      %2675 = vmatpush.msra.mxu0 0.0
      %2676 = vmatpush.msra.mxu0 0.0
      %2677 = vmatpush.msra.mxu0 0.0
      %2678 = vmatpush.msra.mxu0 0.0
      %2679 = vmatpush.msra.mxu0 0.0
      %2680 = vmatpush.msra.mxu0 %v2593
      %2681 = vmatpush.msra.mxu0 %v2592
      %2682 = vmatmul.f32.gmra.mxu0 %v2664
      %v2683 = vpop.f32.mrf.mxu0
      %v2684 = vadd.f32 0.0, %v2683
      %2685 = vdwg.mxu0
      %v2687 = vsel %vm957, %v2588, 0
      %2689 = vmatpush.msra.mxu0 0.0
      %2690 = vmatpush.msra.mxu0 0.0
      %2691 = vmatpush.msra.mxu0 0.0
      %2692 = vmatpush.msra.mxu0 0.0
      %2693 = vmatpush.msra.mxu0 0.0
      %2694 = vmatpush.msra.mxu0 0.0
      %2695 = vmatpush.msra.mxu0 0.0
      %2696 = vmatpush.msra.mxu0 0.0
      %2697 = vmatpush.msra.mxu0 0.0
      %2698 = vmatpush.msra.mxu0 0.0
      %2699 = vmatpush.msra.mxu0 0.0
      %2700 = vmatpush.msra.mxu0 0.0
      %2701 = vmatpush.msra.mxu0 0.0
      %2702 = vmatpush.msra.mxu0 0.0
      %2703 = vmatpush.msra.mxu0 %v2593
      %2704 = vmatpush.msra.mxu0 %v2592
      %2705 = vmatmul.f32.gmra.mxu0 %v2687
      %v2706 = vpop.f32.mrf.mxu0
      %v2707 = vadd.f32 0.0, %v2706
      %2708 = vdwg.mxu0
      %v2710 = vsel %vm957, %v2589, 0
      %2712 = vmatpush.msra.mxu0 0.0
      %2713 = vmatpush.msra.mxu0 0.0
      %2714 = vmatpush.msra.mxu0 0.0
      %2715 = vmatpush.msra.mxu0 0.0
      %2716 = vmatpush.msra.mxu0 0.0
      %2717 = vmatpush.msra.mxu0 0.0
      %2718 = vmatpush.msra.mxu0 0.0
      %2719 = vmatpush.msra.mxu0 0.0
      %2720 = vmatpush.msra.mxu0 0.0
      %2721 = vmatpush.msra.mxu0 0.0
      %2722 = vmatpush.msra.mxu0 0.0
      %2723 = vmatpush.msra.mxu0 0.0
      %2724 = vmatpush.msra.mxu0 0.0
      %2725 = vmatpush.msra.mxu0 0.0
      %2726 = vmatpush.msra.mxu0 %v2593
      %2727 = vmatpush.msra.mxu0 %v2592
      %2728 = vmatmul.f32.gmra.mxu0 %v2710
      %v2729 = vpop.f32.mrf.mxu0
      %v2730 = vadd.f32 0.0, %v2729
      %2731 = vdwg.mxu0
      %v2733 = vsel %vm957, %v2590, 0
      %2735 = vmatpush.msra.mxu0 0.0
      %2736 = vmatpush.msra.mxu0 0.0
      %2737 = vmatpush.msra.mxu0 0.0
      %2738 = vmatpush.msra.mxu0 0.0
      %2739 = vmatpush.msra.mxu0 0.0
      %2740 = vmatpush.msra.mxu0 0.0
      %2741 = vmatpush.msra.mxu0 0.0
      %2742 = vmatpush.msra.mxu0 0.0
      %2743 = vmatpush.msra.mxu0 0.0
      %2744 = vmatpush.msra.mxu0 0.0
      %2745 = vmatpush.msra.mxu0 0.0
      %2746 = vmatpush.msra.mxu0 0.0
      %2747 = vmatpush.msra.mxu0 0.0
      %2748 = vmatpush.msra.mxu0 0.0
      %2749 = vmatpush.msra.mxu0 %v2593
      %2750 = vmatpush.msra.mxu0 %v2592
      %2751 = vmatmul.f32.gmra.mxu0 %v2733
      %v2752 = vpop.f32.mrf.mxu0
      %v2753 = vadd.f32 0.0, %v2752
      %2754 = vdwg.mxu0
      %v2756 = vsel %vm957, %v2591, 0
      %2758 = vmatpush.msra.mxu0 0.0
      %2759 = vmatpush.msra.mxu0 0.0
      %2760 = vmatpush.msra.mxu0 0.0
      %2761 = vmatpush.msra.mxu0 0.0
      %2762 = vmatpush.msra.mxu0 0.0
      %2763 = vmatpush.msra.mxu0 0.0
      %2764 = vmatpush.msra.mxu0 0.0
      %2765 = vmatpush.msra.mxu0 0.0
      %2766 = vmatpush.msra.mxu0 0.0
      %2767 = vmatpush.msra.mxu0 0.0
      %2768 = vmatpush.msra.mxu0 0.0
      %2769 = vmatpush.msra.mxu0 0.0
      %2770 = vmatpush.msra.mxu0 0.0
      %2771 = vmatpush.msra.mxu0 0.0
      %2772 = vmatpush.msra.mxu0 %v2593
      %2773 = vmatpush.msra.mxu0 %v2592
      %2774 = vmatmul.f32.gmra.mxu0 %v2756
      %v2775 = vpop.f32.mrf.mxu0
      %v2776 = vadd.f32 0.0, %v2775
      %2777 = vdwg.mxu0
      %vm2778 = vcmask 16384
      %2779 = vst.msk [vmem:[%s281] sm:$0x1] %vm2778, %v2615
      %2780 = vst.msk [vmem:[%s281 + $0x1] sm:$0x1] %vm2778, %v2638
      %2781 = vst.msk [vmem:[%s281 + $0x2] sm:$0x1] %vm2778, %v2661
      %2782 = vst.msk [vmem:[%s281 + $0x3] sm:$0x1] %vm2778, %v2684
      %2783 = vst.msk [vmem:[%s281 + $0x4] sm:$0x1] %vm2778, %v2707
      %2784 = vst.msk [vmem:[%s281 + $0x5] sm:$0x1] %vm2778, %v2730
      %2785 = vst.msk [vmem:[%s281 + $0x6] sm:$0x1] %vm2778, %v2753
      %2786 = vst.msk [vmem:[%s281 + $0x7] sm:$0x1] %vm2778, %v2776
      %s2787 = smul.u32 8, %s18
      %p2788 = scmp.lt.s32.totalorder %s2787, 15
      %s2789 = scalar_select %p2788, %s2787, 15
      %s2790 = scalar_lea.vmem %s7, %s2789
      // Predicated region
      $region49: #{tpu_custom_call.1} parent=47 // pred_check
        %p2791 = pneg %p188
      $region50: #{tpu_custom_call.1} parent=47 // pred_check_branch
        %2793 = sbr.rel (%p2791) target = $region52
      $region51: #{tpu_custom_call.1} parent=47 // pred_region
        %s2794 = smul.u32 8, %s18
      $region52: #{tpu_custom_call.1} parent=47 // pred_fallthru
        _
    $region48: #{tpu_custom_call.1} parent=5 // pred_fallthru
      _
    %p2795 = scmp.le.s32.totalorder 2, %s13
    // Predicated region
    $region53: #{tpu_custom_call.1} parent=5 // pred_check
      %p2796 = pneg %p2795
    $region54: #{tpu_custom_call.1} parent=5 // pred_check_branch
      %2798 = sbr.rel (%p2796) target = $region56
    $region55: #{tpu_custom_call.1} parent=5 // pred_region
      %s2799 = ssub.s32 %s13, 2
      // Predicated region
      $region57: #{tpu_custom_call.1} parent=55 // pred_check
        %p2800 = pneg %p194
      $region58: #{tpu_custom_call.1} parent=55 // pred_check_branch
        %2802 = sbr.rel (%p2800) target = $region60
      $region59: #{tpu_custom_call.1} parent=55 // pred_region
        %s2803 = smul.u32 8, %s19
        %p2804 = scmp.lt.s32.totalorder %s2803, 15
        %s2805 = scalar_select %p2804, %s2803, 15
        %s2806 = scalar_lea.vmem %s7, %s2805
      $region60: #{tpu_custom_call.1} parent=55 // pred_fallthru
        _
    $region56: #{tpu_custom_call.1} parent=5 // pred_fallthru
      _
  $region6: #{tpu_custom_call.1} parent=0 // loop_footer
    %s17 = sadd.s32 1, %s13
  $region7: #{tpu_custom_call.1} parent=0 // loop_footer_branch
    %12 = sbr.rel target = $region3
  $region8: #{tpu_custom_call.1} parent=0 // loop_exit
    _

</llo_original>
